<compile_context>
chip_gen: v7x
topology: tpu7x:2x2x1
jax: 0.10.0
libtpu: 0.0.40
codegen_flags: <defaults>
</compile_context>

<pallas_src>
import functools

import jax
import jax.numpy as jnp
from jax.experimental import pallas as pl
from jax.experimental.pallas import tpu as pltpu


def _round_up(v, m):
    return ((v + m - 1) // m) * m


def _pad_to(a, shape):
    pads = [(0, t - s) for s, t in zip(a.shape, shape)]
    return jnp.pad(a, pads)


# ----------------------------------------------------------------------------
# Fused kernel: one grid step per encoder (e = 0 -> 2d, e = 1 -> 2d+3d).
# ----------------------------------------------------------------------------
def canonical_shared_kernel(eps_ref,                         # [2*L] f32 (scalar prefetch, SMEM)
                            x_ref, pos_ref, adj_ref,         # shared node data (same block both steps)
                            wemb_ref, w3d_ref,               # per-encoder embedding weights (bf16)
                            w1_ref, b1_ref, w2_ref, b2_ref,  # per-encoder GIN MLP stacks
                            z_ref,                           # [N, D_pad] output block (f32)
                            *, num_layers, residual, emb_dim):
    e = pl.program_id(0)                                     # encoder index

    # ---- initial node embedding (bf16 MXU, f32 accumulation) ----------------
    h = jnp.dot(x_ref[...].astype(jnp.bfloat16), wemb_ref[...],
                preferred_element_type=jnp.float32)
    # 3D positional term: encoder 0's w_3d is all zeros, so this is exactly a
    # no-op there and the 3D injection for encoder 1 (no branch on program_id).
    h = h + jnp.dot(pos_ref[...].astype(jnp.bfloat16), w3d_ref[...],
                    preferred_element_type=jnp.float32)

    adj = adj_ref[...]                                       # bf16; {0,1} entries -> exact

    # ---- GIN message passing: h <- MLP( A @ h + (1+eps) * h ) ---------------
    for l in range(num_layers):
        eps = eps_ref[e * num_layers + l]                    # scalar from SMEM
        agg = jnp.dot(adj, h.astype(jnp.bfloat16),
                      preferred_element_type=jnp.float32) + (1.0 + eps) * h
        hid = jnp.dot(agg.astype(jnp.bfloat16), w1_ref[l],
                      preferred_element_type=jnp.float32) + b1_ref[l]
        hid = jnp.maximum(hid, 0.0)
        h_new = jnp.dot(hid.astype(jnp.bfloat16), w2_ref[l],
                        preferred_element_type=jnp.float32) + b2_ref[l]
        if l < num_layers - 1:                               # no ReLU after last layer (JK='last')
            h_new = jnp.maximum(h_new, 0.0)
        if residual:
            h_new = h_new + h
        h = h_new

    # ---- canonical normalization over node axis (single fused pass) ---------
    # matches torch: (z - z.mean(0)) / z.std(0)   [unbiased std, ddof=1]
    n = h.shape[0]
    sum_h = jnp.sum(h, axis=0, keepdims=True)
    sum_h2 = jnp.sum(h * h, axis=0, keepdims=True)
    mean = sum_h * (1.0 / n)
    var = jnp.maximum((sum_h2 - n * mean * mean) / (n - 1), 0.0)
    # Padded lanes (>= emb_dim) are identically zero -> var == 0; mask them so
    # 0 * rsqrt(0) does not produce NaN. Real lanes keep exact torch semantics
    # (including inf for a genuinely zero-variance feature, same as torch).
    lane = jax.lax.broadcasted_iota(jnp.int32, var.shape, 1)
    var_safe = jnp.where(lane < emb_dim, var, 1.0)
    z_ref[...] = (h - mean) * jax.lax.rsqrt(var_safe)


# ----------------------------------------------------------------------------
# Parameter construction / packing (pad feature dims to 128 lanes, stack the
# two encoders along a leading axis of size 2, cast matmul weights to bf16).
# ----------------------------------------------------------------------------
def init_encoder_params(key, num_layers, f_in, emb_dim):
    """Deterministic synthetic parameters for one GNN_SharedEnc (f32 masters)."""
    hid = 2 * emb_dim                                        # GIN MLP: D -> 2D -> D
    ks = jax.random.split(key, 6)
    scale = 0.1
    return {
        "w_emb": scale * jax.random.normal(ks[0], (f_in, emb_dim), jnp.float32),
        "w_3d":  scale * jax.random.normal(ks[1], (3, emb_dim), jnp.float32),
        "w1":    scale * jax.random.normal(ks[2], (num_layers, emb_dim, hid), jnp.float32),
        "b1":    scale * jax.random.normal(ks[3], (num_layers, 1, hid), jnp.float32),
        "w2":    scale * jax.random.normal(ks[4], (num_layers, hid, emb_dim), jnp.float32),
        "b2":    scale * jax.random.normal(ks[5], (num_layers, 1, emb_dim), jnp.float32),
        "eps":   jnp.zeros((num_layers,), jnp.float32),      # GIN eps init = 0
    }


def pack_params(p2d, p3d, *, num_layers, f_in, emb_dim):
    d_pad = _round_up(emb_dim, 128)
    h_pad = _round_up(2 * emb_dim, 128)
    fin_pad = _round_up(f_in, 8)
    pos_pad = 8                                              # pad 3-wide coords to a full sublane

    def one(p, use_3d):
        w3d = p["w_3d"] if use_3d else jnp.zeros_like(p["w_3d"])
        return {
            "w_emb": _pad_to(p["w_emb"], (fin_pad, d_pad)).astype(jnp.bfloat16),
            "w_3d":  _pad_to(w3d, (pos_pad, d_pad)).astype(jnp.bfloat16),
            "w1":    _pad_to(p["w1"], (num_layers, emb_dim and d_pad, h_pad)).astype(jnp.bfloat16),
            "b1":    _pad_to(p["b1"], (num_layers, 1, h_pad)),
            "w2":    _pad_to(p["w2"], (num_layers, h_pad, d_pad)).astype(jnp.bfloat16),
            "b2":    _pad_to(p["b2"], (num_layers, 1, d_pad)),
        }

    a, b = one(p2d, False), one(p3d, True)
    packed = {k: jnp.stack([a[k], b[k]], axis=0) for k in a}
    packed["eps"] = jnp.concatenate([p2d["eps"], p3d["eps"]], axis=0)  # flat [2*L]
    return packed


# ----------------------------------------------------------------------------
# One fused pallas_call for both encoders.
# ----------------------------------------------------------------------------
def run_canonical_shared(x, pos, adj, packed, *, num_layers, residual, emb_dim):
    n = x.shape[0]
    fin_pad = packed["w_emb"].shape[1]
    pos_pad = packed["w_3d"].shape[1]
    d_pad = packed["w_emb"].shape[-1]
    h_pad = packed["w1"].shape[-1]
    L = num_layers

    x_p = _pad_to(x, (n, fin_pad))
    pos_p = _pad_to(pos, (n, pos_pad))
    # adjacency entries are {0,1}: bf16 cast is exact and halves the largest DMA.
    # (A weighted adjacency would lose precision here.)
    adj_bf = adj.astype(jnp.bfloat16)

    kernel = functools.partial(canonical_shared_kernel,
                               num_layers=num_layers,
                               residual=residual,
                               emb_dim=emb_dim)

    flops_per_enc = (2 * n * fin_pad * d_pad + 2 * n * pos_pad * d_pad
                     + L * (2 * n * n * d_pad + 4 * n * d_pad * h_pad))
    bytes_accessed = (x_p.size * 4 + pos_p.size * 4 + adj_bf.size * 2
                      + sum(int(v.size) * v.dtype.itemsize for v in packed.values())
                      + 2 * n * d_pad * 4)

    grid_spec = pltpu.PrefetchScalarGridSpec(
        num_scalar_prefetch=1,
        grid=(2,),                                            # encoder index
        in_specs=[
            # shared node data: same block for both grid points -> DMA'd once
            pl.BlockSpec((n, fin_pad), lambda e, s: (0, 0)),             # x
            pl.BlockSpec((n, pos_pad), lambda e, s: (0, 0)),             # pos
            pl.BlockSpec((n, n), lambda e, s: (0, 0)),                   # adj (bf16)
            # per-encoder weights, selected via the grid index
            pl.BlockSpec((None, fin_pad, d_pad), lambda e, s: (e, 0, 0)),      # w_emb
            pl.BlockSpec((None, pos_pad, d_pad), lambda e, s: (e, 0, 0)),      # w_3d
            pl.BlockSpec((None, L, d_pad, h_pad), lambda e, s: (e, 0, 0, 0)),  # w1
            pl.BlockSpec((None, L, 1, h_pad), lambda e, s: (e, 0, 0, 0)),      # b1
            pl.BlockSpec((None, L, h_pad, d_pad), lambda e, s: (e, 0, 0, 0)),  # w2
            pl.BlockSpec((None, L, 1, d_pad), lambda e, s: (e, 0, 0, 0)),      # b2
        ],
        out_specs=pl.BlockSpec((None, n, d_pad), lambda e, s: (e, 0, 0)),
    )

    z = pl.pallas_call(
        kernel,
        out_shape=jax.ShapeDtypeStruct((2, n, d_pad), jnp.float32),
        grid_spec=grid_spec,
        compiler_params=pltpu.CompilerParams(
            dimension_semantics=("parallel",),                # two encoders -> two TCs on v7x
            vmem_limit_bytes=64 * 1024 * 1024),
        cost_estimate=pl.CostEstimate(flops=2 * flops_per_enc,
                                      transcendentals=2 * d_pad,
                                      bytes_accessed=bytes_accessed),
    )(packed["eps"], x_p, pos_p, adj_bf,
      packed["w_emb"], packed["w_3d"],
      packed["w1"], packed["b1"], packed["w2"], packed["b2"])

    z = z[:, :, :emb_dim]                                     # drop zero-padded lanes
    return z[0], z[1]


class CanonicalShared:
    """JAX/Pallas counterpart of Canonical_Shared (both encoders fused in one kernel)."""

    def __init__(self, num_layers, emb_dim, f_in, residual=False, seed=0):
        self.num_layers = num_layers
        self.emb_dim = emb_dim
        self.residual = residual
        k2d, k3d = jax.random.split(jax.random.PRNGKey(seed))
        p2d = init_encoder_params(k2d, num_layers, f_in, emb_dim)
        p3d = init_encoder_params(k3d, num_layers, f_in, emb_dim)
        self.packed = pack_params(p2d, p3d, num_layers=num_layers,
                                  f_in=f_in, emb_dim=emb_dim)

    def forward(self, x, pos, adj):
        return run_canonical_shared(x, pos, adj, self.packed,
                                    num_layers=self.num_layers,
                                    residual=self.residual,
                                    emb_dim=self.emb_dim)


if __name__ == "__main__":
    # small deterministic example graph
    # TODO(synk): for production-size graphs on v7x (64 MiB VMEM), row-tile adj
    #             with an additional grid axis instead of one monolithic block.
    N, F_IN, EMB_DIM, NUM_LAYERS = 16, 8, 32, 3

    key = jax.random.PRNGKey(0)
    kx, kp, ka = jax.random.split(key, 3)

    x = jax.random.normal(kx, (N, F_IN), jnp.float32)
    pos = jax.random.normal(kp, (N, 3), jnp.float32)

    # symmetric dense {0,1} adjacency with self-loops removed (GIN self term via eps)
    a = (jax.random.uniform(ka, (N, N)) > 0.7).astype(jnp.float32)
    adj = jnp.clip(a + a.T, 0.0, 1.0) * (1.0 - jnp.eye(N, dtype=jnp.float32))

    model = CanonicalShared(NUM_LAYERS, EMB_DIM, F_IN)

    z1, z2 = model.forward(x, pos, adj)
    jax.block_until_ready((z1, z2))

    assert z1.shape == (N, EMB_DIM) and z2.shape == (N, EMB_DIM)
    assert bool(jnp.all(jnp.isfinite(z1))) and bool(jnp.all(jnp.isfinite(z2)))
    print("KERNEL_OK")
</pallas_src>

<mosaic_0001>
module attributes {stable_mosaic.version = 11 : i64} {
  func.func @canonical_shared_kernel(%arg0: i32, %arg1: memref<6xf32, #tpu.memory_space<smem>>, %arg2: memref<16x8xf32, #tpu.memory_space<vmem>>, %arg3: memref<16x8xf32, #tpu.memory_space<vmem>>, %arg4: memref<16x16xbf16, #tpu.memory_space<vmem>>, %arg5: memref<1x8x128xbf16, #tpu.memory_space<vmem>>, %arg6: memref<1x8x128xbf16, #tpu.memory_space<vmem>>, %arg7: memref<1x3x128x128xbf16, #tpu.memory_space<vmem>>, %arg8: memref<1x3x1x128xf32, #tpu.memory_space<vmem>>, %arg9: memref<1x3x128x128xbf16, #tpu.memory_space<vmem>>, %arg10: memref<1x3x1x128xf32, #tpu.memory_space<vmem>>, %arg11: memref<1x16x128xf32, #tpu.memory_space<vmem>>) attributes {dimension_semantics = [#tpu.dimension_semantics<parallel>], iteration_bounds = array<i64: 2>, scalar_prefetch = 1 : i64, scratch_operands = 0 : i64, tpu.core_type = #tpu.core_type<tc>, window_params = [{pipeline_mode = #tpu.pipeline_mode<synchronous>, transform_indices = @transform_0, window_bounds = array<i64: 16, 8>}, {pipeline_mode = #tpu.pipeline_mode<synchronous>, transform_indices = @transform_1, window_bounds = array<i64: 16, 8>}, {pipeline_mode = #tpu.pipeline_mode<synchronous>, transform_indices = @transform_2, window_bounds = array<i64: 16, 16>}, {transform_indices = @transform_3, window_bounds = array<i64: 1, 8, 128>}, {transform_indices = @transform_4, window_bounds = array<i64: 1, 8, 128>}, {transform_indices = @transform_5, window_bounds = array<i64: 1, 3, 128, 128>}, {transform_indices = @transform_6, window_bounds = array<i64: 1, 3, 1, 128>}, {transform_indices = @transform_7, window_bounds = array<i64: 1, 3, 128, 128>}, {transform_indices = @transform_8, window_bounds = array<i64: 1, 3, 1, 128>}, {transform_indices = @transform_9, window_bounds = array<i64: 1, 16, 128>}]} {
    %c0 = arith.constant 0 : index
    %c0_0 = arith.constant 0 : index
    %0 = vector.load %arg2[%c0, %c0_0] : memref<16x8xf32, #tpu.memory_space<vmem>>, vector<16x8xf32>
    %1 = arith.truncf %0 : vector<16x8xf32> to vector<16x8xbf16>
    %c0_1 = arith.constant 0 : index
    %c0_2 = arith.constant 0 : index
    %c0_3 = arith.constant 0 : index
    %2 = vector.load %arg5[%c0_1, %c0_2, %c0_3] : memref<1x8x128xbf16, #tpu.memory_space<vmem>>, vector<1x8x128xbf16>
    %3 = vector.shape_cast %2 : vector<1x8x128xbf16> to vector<8x128xbf16>
    %cst = arith.constant dense<0.000000e+00> : vector<16x128xf32>
    %4 = tpu.matmul %1, %3, %cst {dimension_numbers = #tpu.dot_dimension_numbers<[1], [0], [0], [1], [0, 0, 1, 1], [], []>} : vector<16x8xbf16>, vector<8x128xbf16>, vector<16x128xf32> -> vector<16x128xf32>
    %c0_4 = arith.constant 0 : index
    %c0_5 = arith.constant 0 : index
    %5 = vector.load %arg3[%c0_4, %c0_5] : memref<16x8xf32, #tpu.memory_space<vmem>>, vector<16x8xf32>
    %6 = arith.truncf %5 : vector<16x8xf32> to vector<16x8xbf16>
    %c0_6 = arith.constant 0 : index
    %c0_7 = arith.constant 0 : index
    %c0_8 = arith.constant 0 : index
    %7 = vector.load %arg6[%c0_6, %c0_7, %c0_8] : memref<1x8x128xbf16, #tpu.memory_space<vmem>>, vector<1x8x128xbf16>
    %8 = vector.shape_cast %7 : vector<1x8x128xbf16> to vector<8x128xbf16>
    %cst_9 = arith.constant dense<0.000000e+00> : vector<16x128xf32>
    %9 = tpu.matmul %6, %8, %cst_9 {dimension_numbers = #tpu.dot_dimension_numbers<[1], [0], [0], [1], [0, 0, 1, 1], [], []>} : vector<16x8xbf16>, vector<8x128xbf16>, vector<16x128xf32> -> vector<16x128xf32>
    %10 = arith.addf %4, %9 : vector<16x128xf32>
    %c0_10 = arith.constant 0 : index
    %c0_11 = arith.constant 0 : index
    %11 = vector.load %arg4[%c0_10, %c0_11] : memref<16x16xbf16, #tpu.memory_space<vmem>>, vector<16x16xbf16>
    %c3_i32 = arith.constant 3 : i32
    %12 = arith.muli %arg0, %c3_i32 : i32
    %c0_i32 = arith.constant 0 : i32
    %13 = arith.addi %12, %c0_i32 : i32
    %14 = arith.index_cast %13 : i32 to index
    %15 = memref.load %arg1[%14] : memref<6xf32, #tpu.memory_space<smem>>
    %16 = arith.truncf %10 : vector<16x128xf32> to vector<16x128xbf16>
    %cst_12 = arith.constant dense<0.000000e+00> : vector<16x128xf32>
    %17 = tpu.matmul %11, %16, %cst_12 {dimension_numbers = #tpu.dot_dimension_numbers<[1], [0], [0], [1], [0, 0, 1, 1], [], []>} : vector<16x16xbf16>, vector<16x128xbf16>, vector<16x128xf32> -> vector<16x128xf32>
    %cst_13 = arith.constant 1.000000e+00 : f32
    %18 = arith.addf %cst_13, %15 : f32
    %19 = vector.broadcast %18 : f32 to vector<16x128xf32>
    %20 = arith.mulf %19, %10 : vector<16x128xf32>
    %21 = arith.addf %17, %20 : vector<16x128xf32>
    %22 = arith.truncf %21 : vector<16x128xf32> to vector<16x128xbf16>
    %c0_14 = arith.constant 0 : index
    %c0_15 = arith.constant 0 : index
    %c0_16 = arith.constant 0 : index
    %c0_17 = arith.constant 0 : index
    %23 = vector.load %arg7[%c0_14, %c0_15, %c0_16, %c0_17] : memref<1x3x128x128xbf16, #tpu.memory_space<vmem>>, vector<1x1x128x128xbf16>
    %24 = vector.shape_cast %23 : vector<1x1x128x128xbf16> to vector<128x128xbf16>
    %cst_18 = arith.constant dense<0.000000e+00> : vector<16x128xf32>
    %25 = tpu.matmul %22, %24, %cst_18 {dimension_numbers = #tpu.dot_dimension_numbers<[1], [0], [0], [1], [0, 0, 1, 1], [], []>} : vector<16x128xbf16>, vector<128x128xbf16>, vector<16x128xf32> -> vector<16x128xf32>
    %c0_19 = arith.constant 0 : index
    %c0_20 = arith.constant 0 : index
    %c0_21 = arith.constant 0 : index
    %c0_22 = arith.constant 0 : index
    %26 = vector.load %arg8[%c0_19, %c0_20, %c0_21, %c0_22] : memref<1x3x1x128xf32, #tpu.memory_space<vmem>>, vector<1x1x1x128xf32>
    %27 = vector.shape_cast %26 : vector<1x1x1x128xf32> to vector<1x128xf32>
    %28 = vector.broadcast %27 : vector<1x128xf32> to vector<16x128xf32>
    %29 = arith.addf %25, %28 : vector<16x128xf32>
    %cst_23 = arith.constant 0.000000e+00 : f32
    %30 = vector.broadcast %cst_23 : f32 to vector<16x128xf32>
    %31 = arith.maximumf %29, %30 : vector<16x128xf32>
    %32 = arith.truncf %31 : vector<16x128xf32> to vector<16x128xbf16>
    %c0_24 = arith.constant 0 : index
    %c0_25 = arith.constant 0 : index
    %c0_26 = arith.constant 0 : index
    %c0_27 = arith.constant 0 : index
    %33 = vector.load %arg9[%c0_24, %c0_25, %c0_26, %c0_27] : memref<1x3x128x128xbf16, #tpu.memory_space<vmem>>, vector<1x1x128x128xbf16>
    %34 = vector.shape_cast %33 : vector<1x1x128x128xbf16> to vector<128x128xbf16>
    %cst_28 = arith.constant dense<0.000000e+00> : vector<16x128xf32>
    %35 = tpu.matmul %32, %34, %cst_28 {dimension_numbers = #tpu.dot_dimension_numbers<[1], [0], [0], [1], [0, 0, 1, 1], [], []>} : vector<16x128xbf16>, vector<128x128xbf16>, vector<16x128xf32> -> vector<16x128xf32>
    %c0_29 = arith.constant 0 : index
    %c0_30 = arith.constant 0 : index
    %c0_31 = arith.constant 0 : index
    %c0_32 = arith.constant 0 : index
    %36 = vector.load %arg10[%c0_29, %c0_30, %c0_31, %c0_32] : memref<1x3x1x128xf32, #tpu.memory_space<vmem>>, vector<1x1x1x128xf32>
    %37 = vector.shape_cast %36 : vector<1x1x1x128xf32> to vector<1x128xf32>
    %38 = vector.broadcast %37 : vector<1x128xf32> to vector<16x128xf32>
    %39 = arith.addf %35, %38 : vector<16x128xf32>
    %cst_33 = arith.constant 0.000000e+00 : f32
    %40 = vector.broadcast %cst_33 : f32 to vector<16x128xf32>
    %41 = arith.maximumf %39, %40 : vector<16x128xf32>
    %c3_i32_34 = arith.constant 3 : i32
    %42 = arith.muli %arg0, %c3_i32_34 : i32
    %c1_i32 = arith.constant 1 : i32
    %43 = arith.addi %42, %c1_i32 : i32
    %44 = arith.index_cast %43 : i32 to index
    %45 = memref.load %arg1[%44] : memref<6xf32, #tpu.memory_space<smem>>
    %46 = arith.truncf %41 : vector<16x128xf32> to vector<16x128xbf16>
    %cst_35 = arith.constant dense<0.000000e+00> : vector<16x128xf32>
    %47 = tpu.matmul %11, %46, %cst_35 {dimension_numbers = #tpu.dot_dimension_numbers<[1], [0], [0], [1], [0, 0, 1, 1], [], []>} : vector<16x16xbf16>, vector<16x128xbf16>, vector<16x128xf32> -> vector<16x128xf32>
    %cst_36 = arith.constant 1.000000e+00 : f32
    %48 = arith.addf %cst_36, %45 : f32
    %49 = vector.broadcast %48 : f32 to vector<16x128xf32>
    %50 = arith.mulf %49, %41 : vector<16x128xf32>
    %51 = arith.addf %47, %50 : vector<16x128xf32>
    %52 = arith.truncf %51 : vector<16x128xf32> to vector<16x128xbf16>
    %c0_37 = arith.constant 0 : index
    %c1 = arith.constant 1 : index
    %c0_38 = arith.constant 0 : index
    %c0_39 = arith.constant 0 : index
    %53 = vector.load %arg7[%c0_37, %c1, %c0_38, %c0_39] : memref<1x3x128x128xbf16, #tpu.memory_space<vmem>>, vector<1x1x128x128xbf16>
    %54 = vector.shape_cast %53 : vector<1x1x128x128xbf16> to vector<128x128xbf16>
    %cst_40 = arith.constant dense<0.000000e+00> : vector<16x128xf32>
    %55 = tpu.matmul %52, %54, %cst_40 {dimension_numbers = #tpu.dot_dimension_numbers<[1], [0], [0], [1], [0, 0, 1, 1], [], []>} : vector<16x128xbf16>, vector<128x128xbf16>, vector<16x128xf32> -> vector<16x128xf32>
    %c0_41 = arith.constant 0 : index
    %c1_42 = arith.constant 1 : index
    %c0_43 = arith.constant 0 : index
    %c0_44 = arith.constant 0 : index
    %56 = vector.load %arg8[%c0_41, %c1_42, %c0_43, %c0_44] : memref<1x3x1x128xf32, #tpu.memory_space<vmem>>, vector<1x1x1x128xf32>
    %57 = vector.shape_cast %56 : vector<1x1x1x128xf32> to vector<1x128xf32>
    %58 = vector.broadcast %57 : vector<1x128xf32> to vector<16x128xf32>
    %59 = arith.addf %55, %58 : vector<16x128xf32>
    %cst_45 = arith.constant 0.000000e+00 : f32
    %60 = vector.broadcast %cst_45 : f32 to vector<16x128xf32>
    %61 = arith.maximumf %59, %60 : vector<16x128xf32>
    %62 = arith.truncf %61 : vector<16x128xf32> to vector<16x128xbf16>
    %c0_46 = arith.constant 0 : index
    %c1_47 = arith.constant 1 : index
    %c0_48 = arith.constant 0 : index
    %c0_49 = arith.constant 0 : index
    %63 = vector.load %arg9[%c0_46, %c1_47, %c0_48, %c0_49] : memref<1x3x128x128xbf16, #tpu.memory_space<vmem>>, vector<1x1x128x128xbf16>
    %64 = vector.shape_cast %63 : vector<1x1x128x128xbf16> to vector<128x128xbf16>
    %cst_50 = arith.constant dense<0.000000e+00> : vector<16x128xf32>
    %65 = tpu.matmul %62, %64, %cst_50 {dimension_numbers = #tpu.dot_dimension_numbers<[1], [0], [0], [1], [0, 0, 1, 1], [], []>} : vector<16x128xbf16>, vector<128x128xbf16>, vector<16x128xf32> -> vector<16x128xf32>
    %c0_51 = arith.constant 0 : index
    %c1_52 = arith.constant 1 : index
    %c0_53 = arith.constant 0 : index
    %c0_54 = arith.constant 0 : index
    %66 = vector.load %arg10[%c0_51, %c1_52, %c0_53, %c0_54] : memref<1x3x1x128xf32, #tpu.memory_space<vmem>>, vector<1x1x1x128xf32>
    %67 = vector.shape_cast %66 : vector<1x1x1x128xf32> to vector<1x128xf32>
    %68 = vector.broadcast %67 : vector<1x128xf32> to vector<16x128xf32>
    %69 = arith.addf %65, %68 : vector<16x128xf32>
    %cst_55 = arith.constant 0.000000e+00 : f32
    %70 = vector.broadcast %cst_55 : f32 to vector<16x128xf32>
    %71 = arith.maximumf %69, %70 : vector<16x128xf32>
    %c3_i32_56 = arith.constant 3 : i32
    %72 = arith.muli %arg0, %c3_i32_56 : i32
    %c2_i32 = arith.constant 2 : i32
    %73 = arith.addi %72, %c2_i32 : i32
    %74 = arith.index_cast %73 : i32 to index
    %75 = memref.load %arg1[%74] : memref<6xf32, #tpu.memory_space<smem>>
    %76 = arith.truncf %71 : vector<16x128xf32> to vector<16x128xbf16>
    %cst_57 = arith.constant dense<0.000000e+00> : vector<16x128xf32>
    %77 = tpu.matmul %11, %76, %cst_57 {dimension_numbers = #tpu.dot_dimension_numbers<[1], [0], [0], [1], [0, 0, 1, 1], [], []>} : vector<16x16xbf16>, vector<16x128xbf16>, vector<16x128xf32> -> vector<16x128xf32>
    %cst_58 = arith.constant 1.000000e+00 : f32
    %78 = arith.addf %cst_58, %75 : f32
    %79 = vector.broadcast %78 : f32 to vector<16x128xf32>
    %80 = arith.mulf %79, %71 : vector<16x128xf32>
    %81 = arith.addf %77, %80 : vector<16x128xf32>
    %82 = arith.truncf %81 : vector<16x128xf32> to vector<16x128xbf16>
    %c0_59 = arith.constant 0 : index
    %c2 = arith.constant 2 : index
    %c0_60 = arith.constant 0 : index
    %c0_61 = arith.constant 0 : index
    %83 = vector.load %arg7[%c0_59, %c2, %c0_60, %c0_61] : memref<1x3x128x128xbf16, #tpu.memory_space<vmem>>, vector<1x1x128x128xbf16>
    %84 = vector.shape_cast %83 : vector<1x1x128x128xbf16> to vector<128x128xbf16>
    %cst_62 = arith.constant dense<0.000000e+00> : vector<16x128xf32>
    %85 = tpu.matmul %82, %84, %cst_62 {dimension_numbers = #tpu.dot_dimension_numbers<[1], [0], [0], [1], [0, 0, 1, 1], [], []>} : vector<16x128xbf16>, vector<128x128xbf16>, vector<16x128xf32> -> vector<16x128xf32>
    %c0_63 = arith.constant 0 : index
    %c2_64 = arith.constant 2 : index
    %c0_65 = arith.constant 0 : index
    %c0_66 = arith.constant 0 : index
    %86 = vector.load %arg8[%c0_63, %c2_64, %c0_65, %c0_66] : memref<1x3x1x128xf32, #tpu.memory_space<vmem>>, vector<1x1x1x128xf32>
    %87 = vector.shape_cast %86 : vector<1x1x1x128xf32> to vector<1x128xf32>
    %88 = vector.broadcast %87 : vector<1x128xf32> to vector<16x128xf32>
    %89 = arith.addf %85, %88 : vector<16x128xf32>
    %cst_67 = arith.constant 0.000000e+00 : f32
    %90 = vector.broadcast %cst_67 : f32 to vector<16x128xf32>
    %91 = arith.maximumf %89, %90 : vector<16x128xf32>
    %92 = arith.truncf %91 : vector<16x128xf32> to vector<16x128xbf16>
    %c0_68 = arith.constant 0 : index
    %c2_69 = arith.constant 2 : index
    %c0_70 = arith.constant 0 : index
    %c0_71 = arith.constant 0 : index
    %93 = vector.load %arg9[%c0_68, %c2_69, %c0_70, %c0_71] : memref<1x3x128x128xbf16, #tpu.memory_space<vmem>>, vector<1x1x128x128xbf16>
    %94 = vector.shape_cast %93 : vector<1x1x128x128xbf16> to vector<128x128xbf16>
    %cst_72 = arith.constant dense<0.000000e+00> : vector<16x128xf32>
    %95 = tpu.matmul %92, %94, %cst_72 {dimension_numbers = #tpu.dot_dimension_numbers<[1], [0], [0], [1], [0, 0, 1, 1], [], []>} : vector<16x128xbf16>, vector<128x128xbf16>, vector<16x128xf32> -> vector<16x128xf32>
    %c0_73 = arith.constant 0 : index
    %c2_74 = arith.constant 2 : index
    %c0_75 = arith.constant 0 : index
    %c0_76 = arith.constant 0 : index
    %96 = vector.load %arg10[%c0_73, %c2_74, %c0_75, %c0_76] : memref<1x3x1x128xf32, #tpu.memory_space<vmem>>, vector<1x1x1x128xf32>
    %97 = vector.shape_cast %96 : vector<1x1x1x128xf32> to vector<1x128xf32>
    %98 = vector.broadcast %97 : vector<1x128xf32> to vector<16x128xf32>
    %99 = arith.addf %95, %98 : vector<16x128xf32>
    %cst_77 = arith.constant dense<0.000000e+00> : vector<128xf32>
    %100 = vector.multi_reduction <add>, %99, %cst_77 [0] : vector<16x128xf32> to vector<128xf32>
    %101 = vector.shape_cast %100 : vector<128xf32> to vector<1x128xf32>
    %102 = arith.mulf %99, %99 : vector<16x128xf32>
    %cst_78 = arith.constant dense<0.000000e+00> : vector<128xf32>
    %103 = vector.multi_reduction <add>, %102, %cst_78 [0] : vector<16x128xf32> to vector<128xf32>
    %104 = vector.shape_cast %103 : vector<128xf32> to vector<1x128xf32>
    %cst_79 = arith.constant 6.250000e-02 : f32
    %105 = vector.broadcast %cst_79 : f32 to vector<1x128xf32>
    %106 = arith.mulf %101, %105 : vector<1x128xf32>
    %cst_80 = arith.constant 1.600000e+01 : f32
    %107 = vector.broadcast %cst_80 : f32 to vector<1x128xf32>
    %108 = arith.mulf %107, %106 : vector<1x128xf32>
    %109 = arith.mulf %108, %106 : vector<1x128xf32>
    %110 = arith.subf %104, %109 : vector<1x128xf32>
    %cst_81 = arith.constant 1.500000e+01 : f32
    %111 = vector.broadcast %cst_81 : f32 to vector<1x128xf32>
    %112 = arith.divf %110, %111 : vector<1x128xf32>
    %cst_82 = arith.constant 0.000000e+00 : f32
    %113 = vector.broadcast %cst_82 : f32 to vector<1x128xf32>
    %114 = arith.maximumf %112, %113 : vector<1x128xf32>
    %115 = tpu.iota {dimensions = array<i32: 1>} : vector<1x128xi32>
    %c32_i32 = arith.constant 32 : i32
    %116 = vector.broadcast %c32_i32 : i32 to vector<1x128xi32>
    %117 = arith.cmpi slt, %115, %116 : vector<1x128xi32>
    %cst_83 = arith.constant 1.000000e+00 : f32
    %118 = vector.broadcast %cst_83 : f32 to vector<1x128xf32>
    %119 = arith.select %117, %114, %118 : vector<1x128xi1>, vector<1x128xf32>
    %120 = vector.broadcast %106 : vector<1x128xf32> to vector<16x128xf32>
    %121 = arith.subf %99, %120 : vector<16x128xf32>
    %122 = math.rsqrt %119 : vector<1x128xf32>
    %123 = vector.broadcast %122 : vector<1x128xf32> to vector<16x128xf32>
    %124 = arith.mulf %121, %123 : vector<16x128xf32>
    %c0_84 = arith.constant 0 : index
    %c0_85 = arith.constant 0 : index
    %c0_86 = arith.constant 0 : index
    %125 = vector.load %arg11[%c0_84, %c0_85, %c0_86] : memref<1x16x128xf32, #tpu.memory_space<vmem>>, vector<1x16x128xf32>
    %126 = vector.shape_cast %125 : vector<1x16x128xf32> to vector<16x128xf32>
    %127 = vector.shape_cast %124 : vector<16x128xf32> to vector<1x16x128xf32>
    tpu.vector_store %arg11[%c0_84, %c0_85, %c0_86], %127 {strides = array<i32>} : memref<1x16x128xf32, #tpu.memory_space<vmem>>, vector<1x16x128xf32>,
    return
  }
  func.func @transform_0(%arg0: i32, %arg1: memref<6xf32, #tpu.memory_space<smem>>) -> (i32, i32) {
    %c0_i32 = arith.constant 0 : i32
    %c0_i32_0 = arith.constant 0 : i32
    %c0_i32_1 = arith.constant 0 : i32
    return %c0_i32, %c0_i32_0 : i32, i32
  }
  func.func @transform_1(%arg0: i32, %arg1: memref<6xf32, #tpu.memory_space<smem>>) -> (i32, i32) {
    %c0_i32 = arith.constant 0 : i32
    %c0_i32_0 = arith.constant 0 : i32
    %c0_i32_1 = arith.constant 0 : i32
    return %c0_i32, %c0_i32_0 : i32, i32
  }
  func.func @transform_2(%arg0: i32, %arg1: memref<6xf32, #tpu.memory_space<smem>>) -> (i32, i32) {
    %c0_i32 = arith.constant 0 : i32
    %c0_i32_0 = arith.constant 0 : i32
    %c0_i32_1 = arith.constant 0 : i32
    return %c0_i32, %c0_i32_0 : i32, i32
  }
  func.func @transform_3(%arg0: i32, %arg1: memref<6xf32, #tpu.memory_space<smem>>) -> (i32, i32, i32) {
    %c0_i32 = arith.constant 0 : i32
    %c0_i32_0 = arith.constant 0 : i32
    %c0_i32_1 = arith.constant 0 : i32
    return %arg0, %c0_i32, %c0_i32_0 : i32, i32, i32
  }
  func.func @transform_4(%arg0: i32, %arg1: memref<6xf32, #tpu.memory_space<smem>>) -> (i32, i32, i32) {
    %c0_i32 = arith.constant 0 : i32
    %c0_i32_0 = arith.constant 0 : i32
    %c0_i32_1 = arith.constant 0 : i32
    return %arg0, %c0_i32, %c0_i32_0 : i32, i32, i32
  }
  func.func @transform_5(%arg0: i32, %arg1: memref<6xf32, #tpu.memory_space<smem>>) -> (i32, i32, i32, i32) {
    %c0_i32 = arith.constant 0 : i32
    %c0_i32_0 = arith.constant 0 : i32
    %c0_i32_1 = arith.constant 0 : i32
    %c0_i32_2 = arith.constant 0 : i32
    return %arg0, %c0_i32, %c0_i32_0, %c0_i32_1 : i32, i32, i32, i32
  }
  func.func @transform_6(%arg0: i32, %arg1: memref<6xf32, #tpu.memory_space<smem>>) -> (i32, i32, i32, i32) {
    %c0_i32 = arith.constant 0 : i32
    %c0_i32_0 = arith.constant 0 : i32
    %c0_i32_1 = arith.constant 0 : i32
    %c0_i32_2 = arith.constant 0 : i32
    return %arg0, %c0_i32, %c0_i32_0, %c0_i32_1 : i32, i32, i32, i32
  }
  func.func @transform_7(%arg0: i32, %arg1: memref<6xf32, #tpu.memory_space<smem>>) -> (i32, i32, i32, i32) {
    %c0_i32 = arith.constant 0 : i32
    %c0_i32_0 = arith.constant 0 : i32
    %c0_i32_1 = arith.constant 0 : i32
    %c0_i32_2 = arith.constant 0 : i32
    return %arg0, %c0_i32, %c0_i32_0, %c0_i32_1 : i32, i32, i32, i32
  }
  func.func @transform_8(%arg0: i32, %arg1: memref<6xf32, #tpu.memory_space<smem>>) -> (i32, i32, i32, i32) {
    %c0_i32 = arith.constant 0 : i32
    %c0_i32_0 = arith.constant 0 : i32
    %c0_i32_1 = arith.constant 0 : i32
    %c0_i32_2 = arith.constant 0 : i32
    return %arg0, %c0_i32, %c0_i32_0, %c0_i32_1 : i32, i32, i32, i32
  }
  func.func @transform_9(%arg0: i32, %arg1: memref<6xf32, #tpu.memory_space<smem>>) -> (i32, i32, i32) {
    %c0_i32 = arith.constant 0 : i32
    %c0_i32_0 = arith.constant 0 : i32
    %c0_i32_1 = arith.constant 0 : i32
    return %arg0, %c0_i32, %c0_i32_0 : i32, i32, i32
  }
}

</mosaic_0001>

<llo_original>
// kernel: tpu_custom_call.1
$region0: #{tpu_custom_call.1}
  #allocation0 [shape = 'u32[]', space=smem, size = 0x4, offset = 0x4, fixed_abs, tag = 'smem constant byte address 0x4 - core index']
  #allocation1 [shape = 'u32[144,128]{1,0:T(1,128)}', space=vmem, size = 0x12000, scoped, tag = 'internal scratch']
  #allocation2 [shape = 's32[1]{0}', space=sflag, size = 0x4, scoped, tag = 'scoped memory for tpu_custom_call.1']
  #allocation3 [shape = 'u8[512]{0}', space=smem, size = 0x200, scoped, tag = 'prefetched SMEM operand 0']
  %s0 = inlined_call_operand.hbm [shape: f32[6], index: 0, kind: input, shape index: {}]
  %s1 = inlined_call_operand.hbm [shape: f32[16,8], index: 1, kind: input, shape index: {}]
  %s2 = inlined_call_operand.hbm [shape: f32[16,8], index: 2, kind: input, shape index: {}]
  %s3 = inlined_call_operand.hbm [shape: bf16[16,16], index: 3, kind: input, shape index: {}]
  %s4 = inlined_call_operand.hbm [shape: bf16[2,8,128], index: 4, kind: input, shape index: {}]
  %s5 = inlined_call_operand.hbm [shape: bf16[2,8,128], index: 5, kind: input, shape index: {}]
  %s6 = inlined_call_operand.hbm [shape: bf16[2,3,128,128], index: 6, kind: input, shape index: {}]
  %s7 = inlined_call_operand.hbm [shape: f32[2,3,1,128], index: 7, kind: input, shape index: {}]
  %s8 = inlined_call_operand.hbm [shape: bf16[2,3,128,128], index: 8, kind: input, shape index: {}]
  %s9 = inlined_call_operand.hbm [shape: f32[2,3,1,128], index: 9, kind: input, shape index: {}]
  %s10 = inlined_call_operand.hbm [shape: f32[2,16,128], index: 10, kind: output, shape index: {}]
  %s11 = sld [smem:[#allocation0]]
  $region105: #{tpu_custom_call.1} parent=0
    _
  %s13 = ssub.s32 1, %s11
  %s14 = scalar_select 0, %s13, %s11
  %16 = dma.hbm_to_smem %s0, 16, [#allocation3], [#allocation2]
  %17 = dma.done [#allocation2], 16
  %18 = sfence
  $region1: #{tpu_custom_call.1} parent=0
    #allocation4 [shape = 'u8[8192]{0}', space=vmem, size = 0x2000, scoped, tag = 'input window, operand 1, single buffered']
    #allocation5 [shape = 's32[2]{0}', space=sflag, size = 0x8, scoped, tag = 'scoped memory for tpu_custom_call.1']
    #allocation6 [shape = 's32[2]{0}', space=sflag, size = 0x8, scoped, tag = 'scoped memory for tpu_custom_call.1']
    #allocation7 [shape = 'u8[8192]{0}', space=vmem, size = 0x2000, scoped, tag = 'input window, operand 2, single buffered']
    #allocation8 [shape = 's32[1]{0}', space=sflag, size = 0x4, scoped, tag = 'scoped memory for tpu_custom_call.1']
    #allocation9 [shape = 'u8[4096]{0}', space=vmem, size = 0x1000, scoped, tag = 'input window, operand 3, single buffered']
    #allocation10 [shape = 'u8[4096]{0}', space=vmem, size = 0x1000, scoped, tag = 'input window, operand 4']
    #allocation11 [shape = 's32[2]{0}', space=sflag, size = 0x8, scoped, tag = 'scoped memory for tpu_custom_call.1']
    #allocation12 [shape = 'u8[4096]{0}', space=vmem, size = 0x1000, scoped, tag = 'input window, operand 5']
    #allocation13 [shape = 'u8[196608]{0}', space=vmem, size = 0x30000, scoped, tag = 'input window, operand 6']
    #allocation14 [shape = 's32[2]{0}', space=sflag, size = 0x8, scoped, tag = 'scoped memory for tpu_custom_call.1']
    #allocation15 [shape = 'u8[3072]{0}', space=vmem, size = 0xc00, scoped, tag = 'input window, operand 7']
    #allocation16 [shape = 'u8[196608]{0}', space=vmem, size = 0x30000, scoped, tag = 'input window, operand 8']
    #allocation17 [shape = 's32[2]{0}', space=sflag, size = 0x8, scoped, tag = 'scoped memory for tpu_custom_call.1']
    #allocation18 [shape = 'u8[3072]{0}', space=vmem, size = 0xc00, scoped, tag = 'input window, operand 9']
    #allocation19 [shape = 'u8[16384]{0}', space=vmem, size = 0x4000, scoped, tag = 'output window, operand 0']
    %19 = vsyncpa [#allocation5], 0
    %20 = vsyncpa [#allocation8], 0
    %21 = vsyncpa [#allocation11], 0
    %s22 = scalar_lea.sflag [#allocation11], 1
    %23 = vsyncpa %s22, 0
    %24 = vsyncpa [#allocation14], 0
    %s25 = scalar_lea.sflag [#allocation14], 1
    %26 = vsyncpa %s25, 0
    %27 = vsyncpa [#allocation17], 0
    %s28 = scalar_lea.sflag [#allocation17], 1
    %29 = vsyncpa %s28, 0
    %30 = vsyncpa [#allocation6], 0
    %s31 = scalar_lea.sflag [#allocation6], 1
    %32 = vsyncpa %s31, 0
    loop: start=0, step=1, limit=4
    $region2: #{tpu_custom_call.1} parent=1 // loop_pre_header
      _
    $region3: #{tpu_custom_call.1} parent=1 // loop_header
      %s34 = sphi 0, %s38
      %p35 = scmp.ge.s32.totalorder %s34, 4
      %s42 = sphi 0, %s42
      %s44 = sphi 0, %s42
      %s45 = sphi 0, %s44
      %s59 = sphi 0, %s45
      %s63 = sphi 0, %s63
      %s65 = sphi 0, %s63
      %s66 = sphi 0, %s65
      %s80 = sphi 0, %s66
      %s84 = sphi 0, %s84
      %s86 = sphi 0, %s84
      %s87 = sphi 0, %s86
      %s101 = sphi 0, %s87
      %s107 = sphi 0, %s109
      %s110 = sphi 0, %s107
      %s111 = sphi 0, %s110
      %s127 = sphi 0, %s111
      %s133 = sphi 0, %s135
      %s136 = sphi 0, %s133
      %s137 = sphi 0, %s136
      %s153 = sphi 0, %s137
      %s159 = sphi 0, %s161
      %s162 = sphi 0, %s159
      %s163 = sphi 0, %s162
      %s179 = sphi 0, %s163
      %s185 = sphi 0, %s187
      %s188 = sphi 0, %s185
      %s189 = sphi 0, %s188
      %s205 = sphi 0, %s189
      %s211 = sphi 0, %s213
      %s214 = sphi 0, %s211
      %s215 = sphi 0, %s214
      %s231 = sphi 0, %s215
      %s237 = sphi 0, %s239
      %s240 = sphi 0, %s237
      %s241 = sphi 0, %s240
      %s257 = sphi 0, %s241
      %s263 = sphi 0, %s265
      %s266 = sphi 0, %s263
      %s267 = sphi 0, %s266
      %s283 = sphi 0, %s267
    $region4: #{tpu_custom_call.1} parent=1 // loop_header_branch
      %37 = sbr.rel (%p35) target = $region8
    $region5: #{tpu_custom_call.1} parent=1 // loop_body
      %s39 = ssub.s32 %s34, 1
      %s40 = ssub.s32 %s34, 2
      %s41 = sadd.s32 %s34, 1
      %s43 = sadd.s32 %s42, 1
      %p46 = scmp.eq.s32.totalorder %s34, 1
      %p47 = scmp.ne.s32.totalorder %s42, %s44
      %p48 = scmp.eq.s32.totalorder %s34, 0
      %p49 = por %p47, %p48
      %p50 = scmp.ne.s32.totalorder %s42, %s44
      %p51 = scmp.eq.s32.totalorder %s39, 1
      %p52 = por %p50, %p51
      %p53 = scmp.ne.s32.totalorder %s44, %s45
      %p54 = scmp.eq.s32.totalorder %s39, 0
      %p55 = por %p53, %p54
      %p56 = scmp.ne.s32.totalorder %s44, %s45
      %p57 = scmp.eq.s32.totalorder %s40, 1
      %p58 = por %p56, %p57
      %p60 = scmp.ne.s32.totalorder %s45, %s59
      %p61 = scmp.eq.s32.totalorder %s40, 0
      %p62 = por %p60, %p61
      %s64 = sadd.s32 %s63, 1
      %p67 = scmp.eq.s32.totalorder %s34, 1
      %p68 = scmp.ne.s32.totalorder %s63, %s65
      %p69 = scmp.eq.s32.totalorder %s34, 0
      %p70 = por %p68, %p69
      %p71 = scmp.ne.s32.totalorder %s63, %s65
      %p72 = scmp.eq.s32.totalorder %s39, 1
      %p73 = por %p71, %p72
      %p74 = scmp.ne.s32.totalorder %s65, %s66
      %p75 = scmp.eq.s32.totalorder %s39, 0
      %p76 = por %p74, %p75
      %p77 = scmp.ne.s32.totalorder %s65, %s66
      %p78 = scmp.eq.s32.totalorder %s40, 1
      %p79 = por %p77, %p78
      %p81 = scmp.ne.s32.totalorder %s66, %s80
      %p82 = scmp.eq.s32.totalorder %s40, 0
      %p83 = por %p81, %p82
      %s85 = sadd.s32 %s84, 1
      %p88 = scmp.eq.s32.totalorder %s34, 1
      %p89 = scmp.ne.s32.totalorder %s84, %s86
      %p90 = scmp.eq.s32.totalorder %s34, 0
      %p91 = por %p89, %p90
      %p92 = scmp.ne.s32.totalorder %s84, %s86
      %p93 = scmp.eq.s32.totalorder %s39, 1
      %p94 = por %p92, %p93
      %p95 = scmp.ne.s32.totalorder %s86, %s87
      %p96 = scmp.eq.s32.totalorder %s39, 0
      %p97 = por %p95, %p96
      %p98 = scmp.ne.s32.totalorder %s86, %s87
      %p99 = scmp.eq.s32.totalorder %s40, 1
      %p100 = por %p98, %p99
      %p102 = scmp.ne.s32.totalorder %s87, %s101
      %p103 = scmp.eq.s32.totalorder %s40, 0
      %p104 = por %p102, %p103
      %s105 = ssub.s32 %s34, %s41
      %p106 = scmp.eq.s32.totalorder %s105, 0
      %s108 = sadd.s32 %s107, 1
      %s109 = scalar_select %p106, %s107, %s108
      %p112 = pneg %p106
      %p113 = scmp.eq.s32.totalorder %s34, 1
      %p114 = por %p112, %p113
      %p115 = scmp.ne.s32.totalorder %s107, %s110
      %p116 = scmp.eq.s32.totalorder %s34, 0
      %p117 = por %p115, %p116
      %p118 = scmp.ne.s32.totalorder %s107, %s110
      %p119 = scmp.eq.s32.totalorder %s39, 1
      %p120 = por %p118, %p119
      %p121 = scmp.ne.s32.totalorder %s110, %s111
      %p122 = scmp.eq.s32.totalorder %s39, 0
      %p123 = por %p121, %p122
      %p124 = scmp.ne.s32.totalorder %s110, %s111
      %p125 = scmp.eq.s32.totalorder %s40, 1
      %p126 = por %p124, %p125
      %p128 = scmp.ne.s32.totalorder %s111, %s127
      %p129 = scmp.eq.s32.totalorder %s40, 0
      %p130 = por %p128, %p129
      %s131 = ssub.s32 %s34, %s41
      %p132 = scmp.eq.s32.totalorder %s131, 0
      %s134 = sadd.s32 %s133, 1
      %s135 = scalar_select %p132, %s133, %s134
      %p138 = pneg %p132
      %p139 = scmp.eq.s32.totalorder %s34, 1
      %p140 = por %p138, %p139
      %p141 = scmp.ne.s32.totalorder %s133, %s136
      %p142 = scmp.eq.s32.totalorder %s34, 0
      %p143 = por %p141, %p142
      %p144 = scmp.ne.s32.totalorder %s133, %s136
      %p145 = scmp.eq.s32.totalorder %s39, 1
      %p146 = por %p144, %p145
      %p147 = scmp.ne.s32.totalorder %s136, %s137
      %p148 = scmp.eq.s32.totalorder %s39, 0
      %p149 = por %p147, %p148
      %p150 = scmp.ne.s32.totalorder %s136, %s137
      %p151 = scmp.eq.s32.totalorder %s40, 1
      %p152 = por %p150, %p151
      %p154 = scmp.ne.s32.totalorder %s137, %s153
      %p155 = scmp.eq.s32.totalorder %s40, 0
      %p156 = por %p154, %p155
      %s157 = ssub.s32 %s34, %s41
      %p158 = scmp.eq.s32.totalorder %s157, 0
      %s160 = sadd.s32 %s159, 1
      %s161 = scalar_select %p158, %s159, %s160
      %p164 = pneg %p158
      %p165 = scmp.eq.s32.totalorder %s34, 1
      %p166 = por %p164, %p165
      %p167 = scmp.ne.s32.totalorder %s159, %s162
      %p168 = scmp.eq.s32.totalorder %s34, 0
      %p169 = por %p167, %p168
      %p170 = scmp.ne.s32.totalorder %s159, %s162
      %p171 = scmp.eq.s32.totalorder %s39, 1
      %p172 = por %p170, %p171
      %p173 = scmp.ne.s32.totalorder %s162, %s163
      %p174 = scmp.eq.s32.totalorder %s39, 0
      %p175 = por %p173, %p174
      %p176 = scmp.ne.s32.totalorder %s162, %s163
      %p177 = scmp.eq.s32.totalorder %s40, 1
      %p178 = por %p176, %p177
      %p180 = scmp.ne.s32.totalorder %s163, %s179
      %p181 = scmp.eq.s32.totalorder %s40, 0
      %p182 = por %p180, %p181
      %s183 = ssub.s32 %s34, %s41
      %p184 = scmp.eq.s32.totalorder %s183, 0
      %s186 = sadd.s32 %s185, 1
      %s187 = scalar_select %p184, %s185, %s186
      %p190 = pneg %p184
      %p191 = scmp.eq.s32.totalorder %s34, 1
      %p192 = por %p190, %p191
      %p193 = scmp.ne.s32.totalorder %s185, %s188
      %p194 = scmp.eq.s32.totalorder %s34, 0
      %p195 = por %p193, %p194
      %p196 = scmp.ne.s32.totalorder %s185, %s188
      %p197 = scmp.eq.s32.totalorder %s39, 1
      %p198 = por %p196, %p197
      %p199 = scmp.ne.s32.totalorder %s188, %s189
      %p200 = scmp.eq.s32.totalorder %s39, 0
      %p201 = por %p199, %p200
      %p202 = scmp.ne.s32.totalorder %s188, %s189
      %p203 = scmp.eq.s32.totalorder %s40, 1
      %p204 = por %p202, %p203
      %p206 = scmp.ne.s32.totalorder %s189, %s205
      %p207 = scmp.eq.s32.totalorder %s40, 0
      %p208 = por %p206, %p207
      %s209 = ssub.s32 %s34, %s41
      %p210 = scmp.eq.s32.totalorder %s209, 0
      %s212 = sadd.s32 %s211, 1
      %s213 = scalar_select %p210, %s211, %s212
      %p216 = pneg %p210
      %p217 = scmp.eq.s32.totalorder %s34, 1
      %p218 = por %p216, %p217
      %p219 = scmp.ne.s32.totalorder %s211, %s214
      %p220 = scmp.eq.s32.totalorder %s34, 0
      %p221 = por %p219, %p220
      %p222 = scmp.ne.s32.totalorder %s211, %s214
      %p223 = scmp.eq.s32.totalorder %s39, 1
      %p224 = por %p222, %p223
      %p225 = scmp.ne.s32.totalorder %s214, %s215
      %p226 = scmp.eq.s32.totalorder %s39, 0
      %p227 = por %p225, %p226
      %p228 = scmp.ne.s32.totalorder %s214, %s215
      %p229 = scmp.eq.s32.totalorder %s40, 1
      %p230 = por %p228, %p229
      %p232 = scmp.ne.s32.totalorder %s215, %s231
      %p233 = scmp.eq.s32.totalorder %s40, 0
      %p234 = por %p232, %p233
      %s235 = ssub.s32 %s34, %s41
      %p236 = scmp.eq.s32.totalorder %s235, 0
      %s238 = sadd.s32 %s237, 1
      %s239 = scalar_select %p236, %s237, %s238
      %p242 = pneg %p236
      %p243 = scmp.eq.s32.totalorder %s34, 1
      %p244 = por %p242, %p243
      %p245 = scmp.ne.s32.totalorder %s237, %s240
      %p246 = scmp.eq.s32.totalorder %s34, 0
      %p247 = por %p245, %p246
      %p248 = scmp.ne.s32.totalorder %s237, %s240
      %p249 = scmp.eq.s32.totalorder %s39, 1
      %p250 = por %p248, %p249
      %p251 = scmp.ne.s32.totalorder %s240, %s241
      %p252 = scmp.eq.s32.totalorder %s39, 0
      %p253 = por %p251, %p252
      %p254 = scmp.ne.s32.totalorder %s240, %s241
      %p255 = scmp.eq.s32.totalorder %s40, 1
      %p256 = por %p254, %p255
      %p258 = scmp.ne.s32.totalorder %s241, %s257
      %p259 = scmp.eq.s32.totalorder %s40, 0
      %p260 = por %p258, %p259
      %s261 = ssub.s32 %s34, %s41
      %p262 = scmp.eq.s32.totalorder %s261, 0
      %s264 = sadd.s32 %s263, 1
      %s265 = scalar_select %p262, %s263, %s264
      %p268 = pneg %p262
      %p269 = scmp.eq.s32.totalorder %s34, 1
      %p270 = por %p268, %p269
      %p271 = scmp.ne.s32.totalorder %s263, %s266
      %p272 = scmp.eq.s32.totalorder %s34, 0
      %p273 = por %p271, %p272
      %p274 = scmp.ne.s32.totalorder %s263, %s266
      %p275 = scmp.eq.s32.totalorder %s39, 1
      %p276 = por %p274, %p275
      %p277 = scmp.ne.s32.totalorder %s266, %s267
      %p278 = scmp.eq.s32.totalorder %s39, 0
      %p279 = por %p277, %p278
      %p280 = scmp.ne.s32.totalorder %s266, %s267
      %p281 = scmp.eq.s32.totalorder %s40, 1
      %p282 = por %p280, %p281
      %p284 = scmp.ne.s32.totalorder %s267, %s283
      %p285 = scmp.eq.s32.totalorder %s40, 0
      %p286 = por %p284, %p285
      %p287 = scmp.le.s32.totalorder 1, %s34
      %p288 = scmp.lt.s32.totalorder %s34, 3
      %p289 = pnand %p287, %p288
      %p290 = pneg %p289
      // Predicated region
      $region9: #{tpu_custom_call.1} parent=5 // pred_check
        _
      $region10: #{tpu_custom_call.1} parent=5 // pred_check_branch
        %292 = sbr.rel (%p289) target = $region12
      $region11: #{tpu_custom_call.1} parent=5 // pred_region
        %s293 = ssub.s32 %s34, 1
        // Predicated region
        $region13: #{tpu_custom_call.1} parent=11 // pred_check
          %p294 = pneg %p55
        $region14: #{tpu_custom_call.1} parent=11 // pred_check_branch
          %296 = sbr.rel (%p294) target = $region16
        $region15: #{tpu_custom_call.1} parent=11 // pred_region
          %s298 = ssub.s32 256, 256
          %299 = vsyncadd [#allocation5], %s298
          %s300 = sshll.u32 [#allocation4], 4
          %s301 = int_to_ptr.vmem [resolvable:$true] %s300
          %306 = dma.hbm_to_vmem [thread:$0]  %s1, 256, %s301, [#allocation5], 128, 128, 8
        $region16: #{tpu_custom_call.1} parent=11 // pred_fallthru
          _
        // Predicated region
        $region17: #{tpu_custom_call.1} parent=11 // pred_check
          %p307 = pneg %p76
        $region18: #{tpu_custom_call.1} parent=11 // pred_check_branch
          %309 = sbr.rel (%p307) target = $region20
        $region19: #{tpu_custom_call.1} parent=11 // pred_region
          %s311 = ssub.s32 256, 256
          %312 = vsyncadd [#allocation8], %s311
          %s313 = sshll.u32 [#allocation7], 4
          %s314 = int_to_ptr.vmem [resolvable:$true] %s313
          %319 = dma.hbm_to_vmem [thread:$0]  %s2, 256, %s314, [#allocation8], 128, 128, 8
        $region20: #{tpu_custom_call.1} parent=11 // pred_fallthru
          _
        // Predicated region
        $region21: #{tpu_custom_call.1} parent=11 // pred_check
          %p320 = pneg %p97
        $region22: #{tpu_custom_call.1} parent=11 // pred_check_branch
          %322 = sbr.rel (%p320) target = $region24
        $region23: #{tpu_custom_call.1} parent=11 // pred_region
          %s324 = ssub.s32 128, 128
          %325 = vsyncadd [#allocation8], %s324
          %s326 = sshll.u32 [#allocation9], 4
          %s327 = int_to_ptr.vmem [resolvable:$true] %s326
          %332 = dma.hbm_to_vmem [thread:$0]  %s3, 128, %s327, [#allocation8], 64, 64, 4
        $region24: #{tpu_custom_call.1} parent=11 // pred_fallthru
          _
      $region12: #{tpu_custom_call.1} parent=5 // pred_fallthru
        _
      %p333 = scmp.lt.s32.totalorder %s34, 2
      // Predicated region
      $region25: #{tpu_custom_call.1} parent=5 // pred_check
        %p334 = pneg %p333
      $region26: #{tpu_custom_call.1} parent=5 // pred_check_branch
        %336 = sbr.rel (%p334) target = $region28
      $region27: #{tpu_custom_call.1} parent=5 // pred_region
        // Predicated region
        $region29: #{tpu_custom_call.1} parent=27 // pred_check
          %p337 = pneg %p117
        $region30: #{tpu_custom_call.1} parent=27 // pred_check_branch
          %339 = sbr.rel (%p337) target = $region32
        $region31: #{tpu_custom_call.1} parent=27 // pred_region
          %s340 = sand.u32 %s34, 1
          %s341 = scalar_lea.sflag [#allocation11], %s340
          %s342 = sand.u32 %s107, 1
          %s343 = smul.addr %s342, 4
          %s344 = scalar_lea.vmem [#allocation10], %s343
          %s346 = ssub.s32 64, 64
          %347 = vsyncadd %s341, %s346
          %s348 = smul.addr %s34, 64
          %s349 = scalar_lea.hbm %s4, %s348
          %s351 = sshll.u32 %s344, 4
          %s352 = int_to_ptr.vmem [resolvable:$true] %s351
          %354 = dma.hbm_to_vmem [thread:$0]  %s349, 64, %s352, %s341
        $region32: #{tpu_custom_call.1} parent=27 // pred_fallthru
          _
        // Predicated region
        $region33: #{tpu_custom_call.1} parent=27 // pred_check
          %p355 = pneg %p143
        $region34: #{tpu_custom_call.1} parent=27 // pred_check_branch
          %357 = sbr.rel (%p355) target = $region36
        $region35: #{tpu_custom_call.1} parent=27 // pred_region
          %s358 = sand.u32 %s34, 1
          %s359 = scalar_lea.sflag [#allocation11], %s358
          %s360 = sand.u32 %s133, 1
          %s361 = smul.addr %s360, 4
          %s362 = scalar_lea.vmem [#allocation12], %s361
          %s364 = ssub.s32 64, 64
          %365 = vsyncadd %s359, %s364
          %s366 = smul.addr %s34, 64
          %s367 = scalar_lea.hbm %s5, %s366
          %s369 = sshll.u32 %s362, 4
          %s370 = int_to_ptr.vmem [resolvable:$true] %s369
          %372 = dma.hbm_to_vmem [thread:$0]  %s367, 64, %s370, %s359
        $region36: #{tpu_custom_call.1} parent=27 // pred_fallthru
          _
        // Predicated region
        $region37: #{tpu_custom_call.1} parent=27 // pred_check
          %p373 = pneg %p169
        $region38: #{tpu_custom_call.1} parent=27 // pred_check_branch
          %375 = sbr.rel (%p373) target = $region40
        $region39: #{tpu_custom_call.1} parent=27 // pred_region
          %s376 = sand.u32 %s34, 1
          %s377 = scalar_lea.sflag [#allocation14], %s376
          %s378 = sand.u32 %s159, 1
          %s379 = smul.addr %s378, 192
          %s380 = scalar_lea.vmem [#allocation13], %s379
          %s382 = ssub.s32 3072, 3072
          %383 = vsyncadd %s377, %s382
          %s384 = smul.addr %s34, 48
          %s385 = smul.addr %s384, 64
          %s386 = scalar_lea.hbm %s6, %s385
          %s387 = sshll.u32 %s380, 4
          %s388 = int_to_ptr.vmem [resolvable:$true] %s387
          %393 = dma.hbm_to_vmem [thread:$0]  %s386, 3072, %s388, %s377, 64, 64, 4
        $region40: #{tpu_custom_call.1} parent=27 // pred_fallthru
          _
        // Predicated region
        $region41: #{tpu_custom_call.1} parent=27 // pred_check
          %p394 = pneg %p195
        $region42: #{tpu_custom_call.1} parent=27 // pred_check_branch
          %396 = sbr.rel (%p394) target = $region44
        $region43: #{tpu_custom_call.1} parent=27 // pred_region
          %s397 = sand.u32 %s34, 1
          %s398 = scalar_lea.sflag [#allocation14], %s397
          %s399 = sand.u32 %s185, 1
          %s400 = smul.addr %s399, 3
          %s401 = scalar_lea.vmem [#allocation15], %s400
          %s403 = ssub.s32 48, 48
          %404 = vsyncadd %s398, %s403
          %s405 = smul.addr %s34, 3
          %s406 = smul.addr %s405, 16
          %s407 = scalar_lea.hbm %s7, %s406
          %s408 = sshll.u32 %s401, 4
          %s409 = int_to_ptr.vmem [resolvable:$true] %s408
          %414 = dma.hbm_to_vmem [thread:$0]  %s407, 48, %s409, %s398, 16, 16, 1
        $region44: #{tpu_custom_call.1} parent=27 // pred_fallthru
          _
        // Predicated region
        $region45: #{tpu_custom_call.1} parent=27 // pred_check
          %p415 = pneg %p221
        $region46: #{tpu_custom_call.1} parent=27 // pred_check_branch
          %417 = sbr.rel (%p415) target = $region48
        $region47: #{tpu_custom_call.1} parent=27 // pred_region
          %s418 = sand.u32 %s34, 1
          %s419 = scalar_lea.sflag [#allocation17], %s418
          %s420 = sand.u32 %s211, 1
          %s421 = smul.addr %s420, 192
          %s422 = scalar_lea.vmem [#allocation16], %s421
          %s424 = ssub.s32 3072, 3072
          %425 = vsyncadd %s419, %s424
          %s426 = smul.addr %s34, 48
          %s427 = smul.addr %s426, 64
          %s428 = scalar_lea.hbm %s8, %s427
          %s429 = sshll.u32 %s422, 4
          %s430 = int_to_ptr.vmem [resolvable:$true] %s429
          %435 = dma.hbm_to_vmem [thread:$0]  %s428, 3072, %s430, %s419, 64, 64, 4
        $region48: #{tpu_custom_call.1} parent=27 // pred_fallthru
          _
        // Predicated region
        $region49: #{tpu_custom_call.1} parent=27 // pred_check
          %p436 = pneg %p247
        $region50: #{tpu_custom_call.1} parent=27 // pred_check_branch
          %438 = sbr.rel (%p436) target = $region52
        $region51: #{tpu_custom_call.1} parent=27 // pred_region
          %s439 = sand.u32 %s34, 1
          %s440 = scalar_lea.sflag [#allocation17], %s439
          %s441 = sand.u32 %s237, 1
          %s442 = smul.addr %s441, 3
          %s443 = scalar_lea.vmem [#allocation18], %s442
          %s445 = ssub.s32 48, 48
          %446 = vsyncadd %s440, %s445
          %s447 = smul.addr %s34, 3
          %s448 = smul.addr %s447, 16
          %s449 = scalar_lea.hbm %s9, %s448
          %s450 = sshll.u32 %s443, 4
          %s451 = int_to_ptr.vmem [resolvable:$true] %s450
          %456 = dma.hbm_to_vmem [thread:$0]  %s449, 48, %s451, %s440, 16, 16, 1
        $region52: #{tpu_custom_call.1} parent=27 // pred_fallthru
          _
      $region28: #{tpu_custom_call.1} parent=5 // pred_fallthru
        _
      %p457 = scmp.le.s32.totalorder 1, %s34
      %p458 = scmp.lt.s32.totalorder %s34, 3
      %p459 = pnand %p457, %p458
      %p460 = pneg %p459
      // Predicated region
      $region53: #{tpu_custom_call.1} parent=5 // pred_check
        _
      $region54: #{tpu_custom_call.1} parent=5 // pred_check_branch
        %462 = sbr.rel (%p459) target = $region56
      $region55: #{tpu_custom_call.1} parent=5 // pred_region
        %s463 = ssub.s32 %s34, 1
        // Predicated region
        $region57: #{tpu_custom_call.1} parent=55 // pred_check
          %p464 = pneg %p55
        $region58: #{tpu_custom_call.1} parent=55 // pred_check_branch
          %466 = sbr.rel (%p464) target = $region60
        $region59: #{tpu_custom_call.1} parent=55 // pred_region
          %467 = dma.done [#allocation5], 256
        $region60: #{tpu_custom_call.1} parent=55 // pred_fallthru
          _
        // Predicated region
        $region61: #{tpu_custom_call.1} parent=55 // pred_check
          %p468 = pneg %p76
        $region62: #{tpu_custom_call.1} parent=55 // pred_check_branch
          %470 = sbr.rel (%p468) target = $region64
        $region63: #{tpu_custom_call.1} parent=55 // pred_region
          %471 = dma.done [#allocation8], 256
        $region64: #{tpu_custom_call.1} parent=55 // pred_fallthru
          _
        // Predicated region
        $region65: #{tpu_custom_call.1} parent=55 // pred_check
          %p472 = pneg %p97
        $region66: #{tpu_custom_call.1} parent=55 // pred_check_branch
          %474 = sbr.rel (%p472) target = $region68
        $region67: #{tpu_custom_call.1} parent=55 // pred_region
          %475 = dma.done [#allocation8], 128
        $region68: #{tpu_custom_call.1} parent=55 // pred_fallthru
          _
        %s476 = sand.u32 %s39, 1
        %s477 = scalar_lea.sflag [#allocation11], %s476
        %s478 = sand.u32 %s110, 1
        %s479 = smul.addr %s478, 4
        %s480 = scalar_lea.vmem [#allocation10], %s479
        // Predicated region
        $region69: #{tpu_custom_call.1} parent=55 // pred_check
          %p481 = pneg %p123
        $region70: #{tpu_custom_call.1} parent=55 // pred_check_branch
          %483 = sbr.rel (%p481) target = $region72
        $region71: #{tpu_custom_call.1} parent=55 // pred_region
          %484 = dma.done %s477, 64
        $region72: #{tpu_custom_call.1} parent=55 // pred_fallthru
          _
        %s485 = sand.u32 %s39, 1
        %s486 = scalar_lea.sflag [#allocation11], %s485
        %s487 = sand.u32 %s136, 1
        %s488 = smul.addr %s487, 4
        %s489 = scalar_lea.vmem [#allocation12], %s488
        // Predicated region
        $region73: #{tpu_custom_call.1} parent=55 // pred_check
          %p490 = pneg %p149
        $region74: #{tpu_custom_call.1} parent=55 // pred_check_branch
          %492 = sbr.rel (%p490) target = $region76
        $region75: #{tpu_custom_call.1} parent=55 // pred_region
          %493 = dma.done %s486, 64
        $region76: #{tpu_custom_call.1} parent=55 // pred_fallthru
          _
        %s494 = sand.u32 %s39, 1
        %s495 = scalar_lea.sflag [#allocation14], %s494
        %s496 = sand.u32 %s162, 1
        %s497 = smul.addr %s496, 192
        %s498 = scalar_lea.vmem [#allocation13], %s497
        // Predicated region
        $region77: #{tpu_custom_call.1} parent=55 // pred_check
          %p499 = pneg %p175
        $region78: #{tpu_custom_call.1} parent=55 // pred_check_branch
          %501 = sbr.rel (%p499) target = $region80
        $region79: #{tpu_custom_call.1} parent=55 // pred_region
          %502 = dma.done %s495, 3072
        $region80: #{tpu_custom_call.1} parent=55 // pred_fallthru
          _
        %s503 = sand.u32 %s39, 1
        %s504 = scalar_lea.sflag [#allocation14], %s503
        %s505 = sand.u32 %s188, 1
        %s506 = smul.addr %s505, 3
        %s507 = scalar_lea.vmem [#allocation15], %s506
        // Predicated region
        $region81: #{tpu_custom_call.1} parent=55 // pred_check
          %p508 = pneg %p201
        $region82: #{tpu_custom_call.1} parent=55 // pred_check_branch
          %510 = sbr.rel (%p508) target = $region84
        $region83: #{tpu_custom_call.1} parent=55 // pred_region
          %511 = dma.done %s504, 48
        $region84: #{tpu_custom_call.1} parent=55 // pred_fallthru
          _
        %s512 = sand.u32 %s39, 1
        %s513 = scalar_lea.sflag [#allocation17], %s512
        %s514 = sand.u32 %s214, 1
        %s515 = smul.addr %s514, 192
        %s516 = scalar_lea.vmem [#allocation16], %s515
        // Predicated region
        $region85: #{tpu_custom_call.1} parent=55 // pred_check
          %p517 = pneg %p227
        $region86: #{tpu_custom_call.1} parent=55 // pred_check_branch
          %519 = sbr.rel (%p517) target = $region88
        $region87: #{tpu_custom_call.1} parent=55 // pred_region
          %520 = dma.done %s513, 3072
        $region88: #{tpu_custom_call.1} parent=55 // pred_fallthru
          _
        %s521 = sand.u32 %s39, 1
        %s522 = scalar_lea.sflag [#allocation17], %s521
        %s523 = sand.u32 %s240, 1
        %s524 = smul.addr %s523, 3
        %s525 = scalar_lea.vmem [#allocation18], %s524
        // Predicated region
        $region89: #{tpu_custom_call.1} parent=55 // pred_check
          %p526 = pneg %p253
        $region90: #{tpu_custom_call.1} parent=55 // pred_check_branch
          %528 = sbr.rel (%p526) target = $region92
        $region91: #{tpu_custom_call.1} parent=55 // pred_region
          %529 = dma.done %s522, 48
        $region92: #{tpu_custom_call.1} parent=55 // pred_fallthru
          _
        %p530 = pneg %p55
        %p531 = pneg %p52
        %p532 = pneg %p76
        %p533 = pneg %p73
        %p534 = pneg %p97
        %p535 = pneg %p94
        %s536 = sand.u32 %s39, 1
        %s537 = scalar_lea.sflag [#allocation11], %s536
        %s538 = sand.u32 %s110, 1
        %s539 = smul.addr %s538, 4
        %s540 = scalar_lea.vmem [#allocation10], %s539
        %p541 = pneg %p123
        %p542 = pneg %p120
        %s543 = sand.u32 %s39, 1
        %s544 = scalar_lea.sflag [#allocation11], %s543
        %s545 = sand.u32 %s136, 1
        %s546 = smul.addr %s545, 4
        %s547 = scalar_lea.vmem [#allocation12], %s546
        %p548 = pneg %p149
        %p549 = pneg %p146
        %s550 = sand.u32 %s39, 1
        %s551 = scalar_lea.sflag [#allocation14], %s550
        %s552 = sand.u32 %s162, 1
        %s553 = smul.addr %s552, 192
        %s554 = scalar_lea.vmem [#allocation13], %s553
        %p555 = pneg %p175
        %p556 = pneg %p172
        %s557 = sand.u32 %s39, 1
        %s558 = scalar_lea.sflag [#allocation14], %s557
        %s559 = sand.u32 %s188, 1
        %s560 = smul.addr %s559, 3
        %s561 = scalar_lea.vmem [#allocation15], %s560
        %p562 = pneg %p201
        %p563 = pneg %p198
        %s564 = sand.u32 %s39, 1
        %s565 = scalar_lea.sflag [#allocation17], %s564
        %s566 = sand.u32 %s214, 1
        %s567 = smul.addr %s566, 192
        %s568 = scalar_lea.vmem [#allocation16], %s567
        %p569 = pneg %p227
        %p570 = pneg %p224
        %s571 = sand.u32 %s39, 1
        %s572 = scalar_lea.sflag [#allocation17], %s571
        %s573 = sand.u32 %s240, 1
        %s574 = smul.addr %s573, 3
        %s575 = scalar_lea.vmem [#allocation18], %s574
        %p576 = pneg %p253
        %p577 = pneg %p250
        %p578 = pneg %p279
        %p579 = pneg %p276
        %s580 = sand.u32 %s266, 1
        %s581 = scalar_lea.sflag [#allocation6], %s580
        %s582 = sand.u32 %s266, 1
        %s583 = smul.addr %s582, 16
        %s584 = scalar_lea.vmem [#allocation19], %s583
        %v586 = vld [vmem:[#allocation4] sm:$0xff]
        %v587 = vld [vmem:[#allocation4 + $0x8] sm:$0xff]
        %v588 = vpack.c.bf16 %v587, %v586
        %v589 = vld [vmem:[%s480] sm:$0xf]
        %v590 = vld [vmem:[#allocation7] sm:$0xff]
        %v591 = vld [vmem:[#allocation7 + $0x8] sm:$0xff]
        %v592 = vpack.c.bf16 %v591, %v590
        %v593 = vld [vmem:[%s489] sm:$0xf]
        %vm594 = vcmask 64512
        %v596 = vsel %vm594, %v592, 0
        %vm598 = vcmask 1043456
        %v600 = vsel %vm598, %v593, 0
        %602 = vmatprep.subr.bf16.mxu0 0
        %603 = vmatpush1.bf16.msra.mxu0 %v600
        %604 = vmatprep.subr.bf16.mxu0 0
        %605 = vmatpush1.bf16.msra.mxu0 0
        %606 = vmatprep.subr.bf16.mxu0 0
        %607 = vmatpush1.bf16.msra.mxu0 0
        %608 = vmatprep.subr.bf16.mxu0 0
        %609 = vmatpush1.bf16.msra.mxu0 0
        %610 = vmatprep.subr.bf16.mxu0 0
        %611 = vmatpush1.bf16.msra.mxu0 0
        %612 = vmatprep.subr.bf16.mxu0 0
        %613 = vmatpush1.bf16.msra.mxu0 0
        %614 = vmatprep.subr.bf16.mxu0 0
        %615 = vmatpush1.bf16.msra.mxu0 0
        %616 = vmatprep.subr.bf16.mxu0 0
        %617 = vmatpush1.bf16.msra.mxu0 0
        %618 = vmatprep.subr.bf16.mxu0 0
        %619 = vmatpush1.bf16.msra.mxu0 0
        %620 = vmatprep.subr.bf16.mxu0 0
        %621 = vmatpush1.bf16.msra.mxu0 0
        %622 = vmatprep.subr.bf16.mxu0 0
        %623 = vmatpush1.bf16.msra.mxu0 0
        %624 = vmatprep.subr.bf16.mxu0 0
        %625 = vmatpush1.bf16.msra.mxu0 0
        %626 = vmatprep.subr.bf16.mxu0 0
        %627 = vmatpush1.bf16.msra.mxu0 0
        %628 = vmatprep.subr.bf16.mxu0 0
        %629 = vmatpush1.bf16.msra.mxu0 0
        %630 = vmatprep.subr.bf16.mxu0 0
        %631 = vmatpush1.bf16.msra.mxu0 0
        %632 = vmatprep.subr.bf16.mxu0 0
        %633 = vmatpush1.bf16.msra.mxu0 0
        %634 = vmatprep.mubr.bf16.mxu0 0
        %635 = vmatmul.mubr.bf16.gmra.mrb[0].mxu0 %v596
        %v636 = vpop.f32.mrb[0].mxu0
        %v637 = vadd.f32 0.0, %v636
        %v638 = vpop.f32.mrb[0].mxu0
        %v639 = vpop.f32.mrb[0].mxu0
        %v640 = vadd.f32 0.0, %v639
        %v641 = vpop.f32.mrb[0].mxu0
        %642 = vdwg.mxu0
        %v644 = vsel %vm594, %v588, 0
        %v647 = vsel %vm598, %v589, 0
        %649 = vmatprep.subr.bf16.mxu0 0
        %650 = vmatpush1.bf16.msra.mxu0 %v647
        %651 = vmatprep.subr.bf16.mxu0 0
        %652 = vmatpush1.bf16.msra.mxu0 0
        %653 = vmatprep.subr.bf16.mxu0 0
        %654 = vmatpush1.bf16.msra.mxu0 0
        %655 = vmatprep.subr.bf16.mxu0 0
        %656 = vmatpush1.bf16.msra.mxu0 0
        %657 = vmatprep.subr.bf16.mxu0 0
        %658 = vmatpush1.bf16.msra.mxu0 0
        %659 = vmatprep.subr.bf16.mxu0 0
        %660 = vmatpush1.bf16.msra.mxu0 0
        %661 = vmatprep.subr.bf16.mxu0 0
        %662 = vmatpush1.bf16.msra.mxu0 0
        %663 = vmatprep.subr.bf16.mxu0 0
        %664 = vmatpush1.bf16.msra.mxu0 0
        %665 = vmatprep.subr.bf16.mxu0 0
        %666 = vmatpush1.bf16.msra.mxu0 0
        %667 = vmatprep.subr.bf16.mxu0 0
        %668 = vmatpush1.bf16.msra.mxu0 0
        %669 = vmatprep.subr.bf16.mxu0 0
        %670 = vmatpush1.bf16.msra.mxu0 0
        %671 = vmatprep.subr.bf16.mxu0 0
        %672 = vmatpush1.bf16.msra.mxu0 0
        %673 = vmatprep.subr.bf16.mxu0 0
        %674 = vmatpush1.bf16.msra.mxu0 0
        %675 = vmatprep.subr.bf16.mxu0 0
        %676 = vmatpush1.bf16.msra.mxu0 0
        %677 = vmatprep.subr.bf16.mxu0 0
        %678 = vmatpush1.bf16.msra.mxu0 0
        %679 = vmatprep.subr.bf16.mxu0 0
        %680 = vmatpush1.bf16.msra.mxu0 0
        %681 = vmatprep.mubr.bf16.mxu0 0
        %682 = vmatmul.mubr.bf16.gmra.mrb[0].mxu0 %v644
        %v683 = vpop.f32.mrb[0].mxu0
        %v684 = vadd.f32 %v637, %v683
        %v685 = vpop.f32.mrb[0].mxu0
        %v686 = vpop.f32.mrb[0].mxu0
        %v687 = vadd.f32 %v640, %v686
        %v688 = vpop.f32.mrb[0].mxu0
        %689 = vdwg.mxu0
        %v690 = vld [vmem:[#allocation9] sm:$0xf]
        %v691 = vld [vmem:[#allocation9 + $0x4] sm:$0xf]
        %s692 = smul.u32 %s39, 3
        %s693 = sld [smem:[#allocation3 + %s692]]
        %v694 = vpack.c.bf16 %v687, %v684
        %s695 = sadd.f32 %s693, 1.0
        %v696 = vstv %s695
        %v697 = vmul.f32 %v696, %v684
        %v698 = vmul.f32 %v696, %v687
        %v701 = vunpack.c.l.b16 %v690
        %v702 = vunpack.c.l.b16 %v691
        %v703 = vpack.c.b16 %v702, %v701
        %vm704 = vcmask 130048
        %v706 = vsel %vm704, %v703, 0
        %708 = vmatprep.subr.bf16.mxu0 0
        %709 = vmatpush1.bf16.msra.mxu0 %v694
        %710 = vmatprep.subr.bf16.mxu0 0
        %711 = vmatpush1.bf16.msra.mxu0 0
        %712 = vmatprep.subr.bf16.mxu0 0
        %713 = vmatpush1.bf16.msra.mxu0 0
        %714 = vmatprep.subr.bf16.mxu0 0
        %715 = vmatpush1.bf16.msra.mxu0 0
        %716 = vmatprep.subr.bf16.mxu0 0
        %717 = vmatpush1.bf16.msra.mxu0 0
        %718 = vmatprep.subr.bf16.mxu0 0
        %719 = vmatpush1.bf16.msra.mxu0 0
        %720 = vmatprep.subr.bf16.mxu0 0
        %721 = vmatpush1.bf16.msra.mxu0 0
        %722 = vmatprep.subr.bf16.mxu0 0
        %723 = vmatpush1.bf16.msra.mxu0 0
        %724 = vmatprep.subr.bf16.mxu0 0
        %725 = vmatpush1.bf16.msra.mxu0 0
        %726 = vmatprep.subr.bf16.mxu0 0
        %727 = vmatpush1.bf16.msra.mxu0 0
        %728 = vmatprep.subr.bf16.mxu0 0
        %729 = vmatpush1.bf16.msra.mxu0 0
        %730 = vmatprep.subr.bf16.mxu0 0
        %731 = vmatpush1.bf16.msra.mxu0 0
        %732 = vmatprep.subr.bf16.mxu0 0
        %733 = vmatpush1.bf16.msra.mxu0 0
        %734 = vmatprep.subr.bf16.mxu0 0
        %735 = vmatpush1.bf16.msra.mxu0 0
        %736 = vmatprep.subr.bf16.mxu0 0
        %737 = vmatpush1.bf16.msra.mxu0 0
        %738 = vmatprep.subr.bf16.mxu0 0
        %739 = vmatpush1.bf16.msra.mxu0 0
        %740 = vmatprep.mubr.bf16.mxu0 0
        %741 = vmatmul.mubr.bf16.gmra.mrb[0].mxu0 %v706
        %v742 = vpop.f32.mrb[0].mxu0
        %v743 = vadd.f32 %v697, %v742
        %v744 = vpop.f32.mrb[0].mxu0
        %v745 = vpop.f32.mrb[0].mxu0
        %v746 = vadd.f32 %v698, %v745
        %v747 = vpop.f32.mrb[0].mxu0
        %748 = vdwg.mxu0
        %v749 = vpack.c.bf16 %v746, %v743
        %v750 = vld [vmem:[%s498] sm:$0xf]
        %v751 = vld [vmem:[%s498 + $0x4] sm:$0xf]
        %v752 = vld [vmem:[%s498 + $0x8] sm:$0xf]
        %v753 = vld [vmem:[%s498 + $0xc] sm:$0xf]
        %v754 = vld [vmem:[%s498 + $0x10] sm:$0xf]
        %v755 = vld [vmem:[%s498 + $0x14] sm:$0xf]
        %v756 = vld [vmem:[%s498 + $0x18] sm:$0xf]
        %v757 = vld [vmem:[%s498 + $0x1c] sm:$0xf]
        %v758 = vld [vmem:[%s498 + $0x20] sm:$0xf]
        %v759 = vld [vmem:[%s498 + $0x24] sm:$0xf]
        %v760 = vld [vmem:[%s498 + $0x28] sm:$0xf]
        %v761 = vld [vmem:[%s498 + $0x2c] sm:$0xf]
        %v762 = vld [vmem:[%s498 + $0x30] sm:$0xf]
        %v763 = vld [vmem:[%s498 + $0x34] sm:$0xf]
        %v764 = vld [vmem:[%s498 + $0x38] sm:$0xf]
        %v765 = vld [vmem:[%s498 + $0x3c] sm:$0xf]
        %v766 = vld [vmem:[%s507] sm:$0x1]
        %v768 = vlaneseq
        %v769 = vshrl.u32 %v768, 7
        %v770 = vsub.s32 0, %v769
        %v771 = vrot.slane %v766, %v770
        %v789 = vunpack.c.l.b16 %v750
        %v790 = vunpack.c.l.b16 %v751
        %v791 = vunpack.c.l.b16 %v752
        %v792 = vunpack.c.l.b16 %v753
        %v793 = vunpack.c.l.b16 %v754
        %v794 = vunpack.c.l.b16 %v755
        %v795 = vunpack.c.l.b16 %v756
        %v796 = vunpack.c.l.b16 %v757
        %v797 = vunpack.c.l.b16 %v758
        %v798 = vunpack.c.l.b16 %v759
        %v799 = vunpack.c.l.b16 %v760
        %v800 = vunpack.c.l.b16 %v761
        %v801 = vunpack.c.l.b16 %v762
        %v802 = vunpack.c.l.b16 %v763
        %v803 = vunpack.c.l.b16 %v764
        %v804 = vunpack.c.l.b16 %v765
        %v805 = vpack.c.b16 %v790, %v789
        %v806 = vpack.c.b16 %v792, %v791
        %v807 = vpack.c.b16 %v794, %v793
        %v808 = vpack.c.b16 %v796, %v795
        %v809 = vpack.c.b16 %v798, %v797
        %v810 = vpack.c.b16 %v800, %v799
        %v811 = vpack.c.b16 %v802, %v801
        %v812 = vpack.c.b16 %v804, %v803
        %821 = vmatprep.subr.bf16.mxu0 0
        %822 = vmatpush1.bf16.msra.mxu0 %v805
        %823 = vmatprep.subr.bf16.mxu0 0
        %824 = vmatpush1.bf16.msra.mxu0 %v806
        %825 = vmatprep.subr.bf16.mxu0 0
        %826 = vmatpush1.bf16.msra.mxu0 %v807
        %827 = vmatprep.subr.bf16.mxu0 0
        %828 = vmatpush1.bf16.msra.mxu0 %v808
        %829 = vmatprep.subr.bf16.mxu0 0
        %830 = vmatpush1.bf16.msra.mxu0 %v809
        %831 = vmatprep.subr.bf16.mxu0 0
        %832 = vmatpush1.bf16.msra.mxu0 %v810
        %833 = vmatprep.subr.bf16.mxu0 0
        %834 = vmatpush1.bf16.msra.mxu0 %v811
        %835 = vmatprep.subr.bf16.mxu0 0
        %836 = vmatpush1.bf16.msra.mxu0 %v812
        %837 = vmatprep.subr.bf16.mxu0 0
        %838 = vmatpush1.bf16.msra.mxu0 0
        %839 = vmatprep.subr.bf16.mxu0 0
        %840 = vmatpush1.bf16.msra.mxu0 0
        %841 = vmatprep.subr.bf16.mxu0 0
        %842 = vmatpush1.bf16.msra.mxu0 0
        %843 = vmatprep.subr.bf16.mxu0 0
        %844 = vmatpush1.bf16.msra.mxu0 0
        %845 = vmatprep.subr.bf16.mxu0 0
        %846 = vmatpush1.bf16.msra.mxu0 0
        %847 = vmatprep.subr.bf16.mxu0 0
        %848 = vmatpush1.bf16.msra.mxu0 0
        %849 = vmatprep.subr.bf16.mxu0 0
        %850 = vmatpush1.bf16.msra.mxu0 0
        %851 = vmatprep.subr.bf16.mxu0 0
        %852 = vmatpush1.bf16.msra.mxu0 0
        %853 = vmatprep.mubr.bf16.mxu0 0
        %854 = vmatmul.mubr.bf16.gmra.mrb[0].mxu0 %v749
        %v855 = vpop.f32.mrb[0].mxu0
        %v856 = vadd.f32 %v771, %v855
        %v857 = vpop.f32.mrb[0].mxu0
        %v858 = vpop.f32.mrb[0].mxu0
        %v859 = vadd.f32 %v771, %v858
        %v860 = vpop.f32.mrb[0].mxu0
        %861 = vdwg.mxu0
        %v862 = vmax.f32 %v856, 0.0
        %v863 = vmax.f32 %v859, 0.0
        %v864 = vpack.c.bf16 %v863, %v862
        %v865 = vld [vmem:[%s516] sm:$0xf]
        %v866 = vld [vmem:[%s516 + $0x4] sm:$0xf]
        %v867 = vld [vmem:[%s516 + $0x8] sm:$0xf]
        %v868 = vld [vmem:[%s516 + $0xc] sm:$0xf]
        %v869 = vld [vmem:[%s516 + $0x10] sm:$0xf]
        %v870 = vld [vmem:[%s516 + $0x14] sm:$0xf]
        %v871 = vld [vmem:[%s516 + $0x18] sm:$0xf]
        %v872 = vld [vmem:[%s516 + $0x1c] sm:$0xf]
        %v873 = vld [vmem:[%s516 + $0x20] sm:$0xf]
        %v874 = vld [vmem:[%s516 + $0x24] sm:$0xf]
        %v875 = vld [vmem:[%s516 + $0x28] sm:$0xf]
        %v876 = vld [vmem:[%s516 + $0x2c] sm:$0xf]
        %v877 = vld [vmem:[%s516 + $0x30] sm:$0xf]
        %v878 = vld [vmem:[%s516 + $0x34] sm:$0xf]
        %v879 = vld [vmem:[%s516 + $0x38] sm:$0xf]
        %v880 = vld [vmem:[%s516 + $0x3c] sm:$0xf]
        %v881 = vld [vmem:[%s525] sm:$0x1]
        %v883 = vlaneseq
        %v884 = vshrl.u32 %v883, 7
        %v885 = vsub.s32 0, %v884
        %v886 = vrot.slane %v881, %v885
        %v904 = vunpack.c.l.b16 %v865
        %v905 = vunpack.c.l.b16 %v866
        %v906 = vunpack.c.l.b16 %v867
        %v907 = vunpack.c.l.b16 %v868
        %v908 = vunpack.c.l.b16 %v869
        %v909 = vunpack.c.l.b16 %v870
        %v910 = vunpack.c.l.b16 %v871
        %v911 = vunpack.c.l.b16 %v872
        %v912 = vunpack.c.l.b16 %v873
        %v913 = vunpack.c.l.b16 %v874
        %v914 = vunpack.c.l.b16 %v875
        %v915 = vunpack.c.l.b16 %v876
        %v916 = vunpack.c.l.b16 %v877
        %v917 = vunpack.c.l.b16 %v878
        %v918 = vunpack.c.l.b16 %v879
        %v919 = vunpack.c.l.b16 %v880
        %v920 = vpack.c.b16 %v905, %v904
        %v921 = vpack.c.b16 %v907, %v906
        %v922 = vpack.c.b16 %v909, %v908
        %v923 = vpack.c.b16 %v911, %v910
        %v924 = vpack.c.b16 %v913, %v912
        %v925 = vpack.c.b16 %v915, %v914
        %v926 = vpack.c.b16 %v917, %v916
        %v927 = vpack.c.b16 %v919, %v918
        %936 = vmatprep.subr.bf16.mxu0 0
        %937 = vmatpush1.bf16.msra.mxu0 %v920
        %938 = vmatprep.subr.bf16.mxu0 0
        %939 = vmatpush1.bf16.msra.mxu0 %v921
        %940 = vmatprep.subr.bf16.mxu0 0
        %941 = vmatpush1.bf16.msra.mxu0 %v922
        %942 = vmatprep.subr.bf16.mxu0 0
        %943 = vmatpush1.bf16.msra.mxu0 %v923
        %944 = vmatprep.subr.bf16.mxu0 0
        %945 = vmatpush1.bf16.msra.mxu0 %v924
        %946 = vmatprep.subr.bf16.mxu0 0
        %947 = vmatpush1.bf16.msra.mxu0 %v925
        %948 = vmatprep.subr.bf16.mxu0 0
        %949 = vmatpush1.bf16.msra.mxu0 %v926
        %950 = vmatprep.subr.bf16.mxu0 0
        %951 = vmatpush1.bf16.msra.mxu0 %v927
        %952 = vmatprep.subr.bf16.mxu0 0
        %953 = vmatpush1.bf16.msra.mxu0 0
        %954 = vmatprep.subr.bf16.mxu0 0
        %955 = vmatpush1.bf16.msra.mxu0 0
        %956 = vmatprep.subr.bf16.mxu0 0
        %957 = vmatpush1.bf16.msra.mxu0 0
        %958 = vmatprep.subr.bf16.mxu0 0
        %959 = vmatpush1.bf16.msra.mxu0 0
        %960 = vmatprep.subr.bf16.mxu0 0
        %961 = vmatpush1.bf16.msra.mxu0 0
        %962 = vmatprep.subr.bf16.mxu0 0
        %963 = vmatpush1.bf16.msra.mxu0 0
        %964 = vmatprep.subr.bf16.mxu0 0
        %965 = vmatpush1.bf16.msra.mxu0 0
        %966 = vmatprep.subr.bf16.mxu0 0
        %967 = vmatpush1.bf16.msra.mxu0 0
        %968 = vmatprep.mubr.bf16.mxu0 0
        %969 = vmatmul.mubr.bf16.gmra.mrb[0].mxu0 %v864
        %v970 = vpop.f32.mrb[0].mxu0
        %v971 = vadd.f32 %v886, %v970
        %v972 = vpop.f32.mrb[0].mxu0
        %v973 = vpop.f32.mrb[0].mxu0
        %v974 = vadd.f32 %v886, %v973
        %v975 = vpop.f32.mrb[0].mxu0
        %976 = vdwg.mxu0
        %v977 = vmax.f32 %v971, 0.0
        %v978 = vmax.f32 %v974, 0.0
        %s979 = sadd.s32 %s692, 1
        %s980 = sld [smem:[#allocation3 + %s979]]
        %v981 = vpack.c.bf16 %v978, %v977
        %s982 = sadd.f32 %s980, 1.0
        %v983 = vstv %s982
        %v984 = vmul.f32 %v983, %v977
        %v985 = vmul.f32 %v983, %v978
        %986 = vmatprep.subr.bf16.mxu0 0
        %987 = vmatpush1.bf16.msra.mxu0 %v981
        %988 = vmatprep.subr.bf16.mxu0 0
        %989 = vmatpush1.bf16.msra.mxu0 0
        %990 = vmatprep.subr.bf16.mxu0 0
        %991 = vmatpush1.bf16.msra.mxu0 0
        %992 = vmatprep.subr.bf16.mxu0 0
        %993 = vmatpush1.bf16.msra.mxu0 0
        %994 = vmatprep.subr.bf16.mxu0 0
        %995 = vmatpush1.bf16.msra.mxu0 0
        %996 = vmatprep.subr.bf16.mxu0 0
        %997 = vmatpush1.bf16.msra.mxu0 0
        %998 = vmatprep.subr.bf16.mxu0 0
        %999 = vmatpush1.bf16.msra.mxu0 0
        %1000 = vmatprep.subr.bf16.mxu0 0
        %1001 = vmatpush1.bf16.msra.mxu0 0
        %1002 = vmatprep.subr.bf16.mxu0 0
        %1003 = vmatpush1.bf16.msra.mxu0 0
        %1004 = vmatprep.subr.bf16.mxu0 0
        %1005 = vmatpush1.bf16.msra.mxu0 0
        %1006 = vmatprep.subr.bf16.mxu0 0
        %1007 = vmatpush1.bf16.msra.mxu0 0
        %1008 = vmatprep.subr.bf16.mxu0 0
        %1009 = vmatpush1.bf16.msra.mxu0 0
        %1010 = vmatprep.subr.bf16.mxu0 0
        %1011 = vmatpush1.bf16.msra.mxu0 0
        %1012 = vmatprep.subr.bf16.mxu0 0
        %1013 = vmatpush1.bf16.msra.mxu0 0
        %1014 = vmatprep.subr.bf16.mxu0 0
        %1015 = vmatpush1.bf16.msra.mxu0 0
        %1016 = vmatprep.subr.bf16.mxu0 0
        %1017 = vmatpush1.bf16.msra.mxu0 0
        %1018 = vmatprep.mubr.bf16.mxu0 0
        %1019 = vmatmul.mubr.bf16.gmra.mrb[0].mxu0 %v706
        %v1020 = vpop.f32.mrb[0].mxu0
        %v1021 = vadd.f32 %v984, %v1020
        %v1022 = vpop.f32.mrb[0].mxu0
        %v1023 = vpop.f32.mrb[0].mxu0
        %v1024 = vadd.f32 %v985, %v1023
        %v1025 = vpop.f32.mrb[0].mxu0
        %1026 = vdwg.mxu0
        %v1027 = vpack.c.bf16 %v1024, %v1021
        %s1028 = scalar_lea.vmem %s498, 64 [#allocation13]
        %v1029 = vld [vmem:[%s1028] sm:$0xf]
        %v1030 = vld [vmem:[%s1028 + $0x4] sm:$0xf]
        %v1031 = vld [vmem:[%s1028 + $0x8] sm:$0xf]
        %v1032 = vld [vmem:[%s1028 + $0xc] sm:$0xf]
        %v1033 = vld [vmem:[%s1028 + $0x10] sm:$0xf]
        %v1034 = vld [vmem:[%s1028 + $0x14] sm:$0xf]
        %v1035 = vld [vmem:[%s1028 + $0x18] sm:$0xf]
        %v1036 = vld [vmem:[%s1028 + $0x1c] sm:$0xf]
        %v1037 = vld [vmem:[%s1028 + $0x20] sm:$0xf]
        %v1038 = vld [vmem:[%s1028 + $0x24] sm:$0xf]
        %v1039 = vld [vmem:[%s1028 + $0x28] sm:$0xf]
        %v1040 = vld [vmem:[%s1028 + $0x2c] sm:$0xf]
        %v1041 = vld [vmem:[%s1028 + $0x30] sm:$0xf]
        %v1042 = vld [vmem:[%s1028 + $0x34] sm:$0xf]
        %v1043 = vld [vmem:[%s1028 + $0x38] sm:$0xf]
        %v1044 = vld [vmem:[%s1028 + $0x3c] sm:$0xf]
        %s1045 = scalar_lea.vmem %s507, 1 [#allocation15]
        %v1046 = vld [vmem:[%s1045] sm:$0x1]
        %v1048 = vlaneseq
        %v1049 = vshrl.u32 %v1048, 7
        %v1050 = vsub.s32 0, %v1049
        %v1051 = vrot.slane %v1046, %v1050
        %v1069 = vunpack.c.l.b16 %v1029
        %v1070 = vunpack.c.l.b16 %v1030
        %v1071 = vunpack.c.l.b16 %v1031
        %v1072 = vunpack.c.l.b16 %v1032
        %v1073 = vunpack.c.l.b16 %v1033
        %v1074 = vunpack.c.l.b16 %v1034
        %v1075 = vunpack.c.l.b16 %v1035
        %v1076 = vunpack.c.l.b16 %v1036
        %v1077 = vunpack.c.l.b16 %v1037
        %v1078 = vunpack.c.l.b16 %v1038
        %v1079 = vunpack.c.l.b16 %v1039
        %v1080 = vunpack.c.l.b16 %v1040
        %v1081 = vunpack.c.l.b16 %v1041
        %v1082 = vunpack.c.l.b16 %v1042
        %v1083 = vunpack.c.l.b16 %v1043
        %v1084 = vunpack.c.l.b16 %v1044
        %v1085 = vpack.c.b16 %v1070, %v1069
        %v1086 = vpack.c.b16 %v1072, %v1071
        %v1087 = vpack.c.b16 %v1074, %v1073
        %v1088 = vpack.c.b16 %v1076, %v1075
        %v1089 = vpack.c.b16 %v1078, %v1077
        %v1090 = vpack.c.b16 %v1080, %v1079
        %v1091 = vpack.c.b16 %v1082, %v1081
        %v1092 = vpack.c.b16 %v1084, %v1083
        %1101 = vmatprep.subr.bf16.mxu0 0
        %1102 = vmatpush1.bf16.msra.mxu0 %v1085
        %1103 = vmatprep.subr.bf16.mxu0 0
        %1104 = vmatpush1.bf16.msra.mxu0 %v1086
        %1105 = vmatprep.subr.bf16.mxu0 0
        %1106 = vmatpush1.bf16.msra.mxu0 %v1087
        %1107 = vmatprep.subr.bf16.mxu0 0
        %1108 = vmatpush1.bf16.msra.mxu0 %v1088
        %1109 = vmatprep.subr.bf16.mxu0 0
        %1110 = vmatpush1.bf16.msra.mxu0 %v1089
        %1111 = vmatprep.subr.bf16.mxu0 0
        %1112 = vmatpush1.bf16.msra.mxu0 %v1090
        %1113 = vmatprep.subr.bf16.mxu0 0
        %1114 = vmatpush1.bf16.msra.mxu0 %v1091
        %1115 = vmatprep.subr.bf16.mxu0 0
        %1116 = vmatpush1.bf16.msra.mxu0 %v1092
        %1117 = vmatprep.subr.bf16.mxu0 0
        %1118 = vmatpush1.bf16.msra.mxu0 0
        %1119 = vmatprep.subr.bf16.mxu0 0
        %1120 = vmatpush1.bf16.msra.mxu0 0
        %1121 = vmatprep.subr.bf16.mxu0 0
        %1122 = vmatpush1.bf16.msra.mxu0 0
        %1123 = vmatprep.subr.bf16.mxu0 0
        %1124 = vmatpush1.bf16.msra.mxu0 0
        %1125 = vmatprep.subr.bf16.mxu0 0
        %1126 = vmatpush1.bf16.msra.mxu0 0
        %1127 = vmatprep.subr.bf16.mxu0 0
        %1128 = vmatpush1.bf16.msra.mxu0 0
        %1129 = vmatprep.subr.bf16.mxu0 0
        %1130 = vmatpush1.bf16.msra.mxu0 0
        %1131 = vmatprep.subr.bf16.mxu0 0
        %1132 = vmatpush1.bf16.msra.mxu0 0
        %1133 = vmatprep.mubr.bf16.mxu0 0
        %1134 = vmatmul.mubr.bf16.gmra.mrb[0].mxu0 %v1027
        %v1135 = vpop.f32.mrb[0].mxu0
        %v1136 = vadd.f32 %v1051, %v1135
        %v1137 = vpop.f32.mrb[0].mxu0
        %v1138 = vpop.f32.mrb[0].mxu0
        %v1139 = vadd.f32 %v1051, %v1138
        %v1140 = vpop.f32.mrb[0].mxu0
        %1141 = vdwg.mxu0
        %v1142 = vmax.f32 %v1136, 0.0
        %v1143 = vmax.f32 %v1139, 0.0
        %v1144 = vpack.c.bf16 %v1143, %v1142
        %s1145 = scalar_lea.vmem %s516, 64 [#allocation16]
        %v1146 = vld [vmem:[%s1145] sm:$0xf]
        %v1147 = vld [vmem:[%s1145 + $0x4] sm:$0xf]
        %v1148 = vld [vmem:[%s1145 + $0x8] sm:$0xf]
        %v1149 = vld [vmem:[%s1145 + $0xc] sm:$0xf]
        %v1150 = vld [vmem:[%s1145 + $0x10] sm:$0xf]
        %v1151 = vld [vmem:[%s1145 + $0x14] sm:$0xf]
        %v1152 = vld [vmem:[%s1145 + $0x18] sm:$0xf]
        %v1153 = vld [vmem:[%s1145 + $0x1c] sm:$0xf]
        %v1154 = vld [vmem:[%s1145 + $0x20] sm:$0xf]
        %v1155 = vld [vmem:[%s1145 + $0x24] sm:$0xf]
        %v1156 = vld [vmem:[%s1145 + $0x28] sm:$0xf]
        %v1157 = vld [vmem:[%s1145 + $0x2c] sm:$0xf]
        %v1158 = vld [vmem:[%s1145 + $0x30] sm:$0xf]
        %v1159 = vld [vmem:[%s1145 + $0x34] sm:$0xf]
        %v1160 = vld [vmem:[%s1145 + $0x38] sm:$0xf]
        %v1161 = vld [vmem:[%s1145 + $0x3c] sm:$0xf]
        %s1162 = scalar_lea.vmem %s525, 1 [#allocation18]
        %v1163 = vld [vmem:[%s1162] sm:$0x1]
        %v1165 = vlaneseq
        %v1166 = vshrl.u32 %v1165, 7
        %v1167 = vsub.s32 0, %v1166
        %v1168 = vrot.slane %v1163, %v1167
        %v1186 = vunpack.c.l.b16 %v1146
        %v1187 = vunpack.c.l.b16 %v1147
        %v1188 = vunpack.c.l.b16 %v1148
        %v1189 = vunpack.c.l.b16 %v1149
        %v1190 = vunpack.c.l.b16 %v1150
        %v1191 = vunpack.c.l.b16 %v1151
        %v1192 = vunpack.c.l.b16 %v1152
        %v1193 = vunpack.c.l.b16 %v1153
        %v1194 = vunpack.c.l.b16 %v1154
        %v1195 = vunpack.c.l.b16 %v1155
        %v1196 = vunpack.c.l.b16 %v1156
        %v1197 = vunpack.c.l.b16 %v1157
        %v1198 = vunpack.c.l.b16 %v1158
        %v1199 = vunpack.c.l.b16 %v1159
        %v1200 = vunpack.c.l.b16 %v1160
        %v1201 = vunpack.c.l.b16 %v1161
        %v1202 = vpack.c.b16 %v1187, %v1186
        %v1203 = vpack.c.b16 %v1189, %v1188
        %v1204 = vpack.c.b16 %v1191, %v1190
        %v1205 = vpack.c.b16 %v1193, %v1192
        %v1206 = vpack.c.b16 %v1195, %v1194
        %v1207 = vpack.c.b16 %v1197, %v1196
        %v1208 = vpack.c.b16 %v1199, %v1198
        %v1209 = vpack.c.b16 %v1201, %v1200
        %1218 = vmatprep.subr.bf16.mxu0 0
        %1219 = vmatpush1.bf16.msra.mxu0 %v1202
        %1220 = vmatprep.subr.bf16.mxu0 0
        %1221 = vmatpush1.bf16.msra.mxu0 %v1203
        %1222 = vmatprep.subr.bf16.mxu0 0
        %1223 = vmatpush1.bf16.msra.mxu0 %v1204
        %1224 = vmatprep.subr.bf16.mxu0 0
        %1225 = vmatpush1.bf16.msra.mxu0 %v1205
        %1226 = vmatprep.subr.bf16.mxu0 0
        %1227 = vmatpush1.bf16.msra.mxu0 %v1206
        %1228 = vmatprep.subr.bf16.mxu0 0
        %1229 = vmatpush1.bf16.msra.mxu0 %v1207
        %1230 = vmatprep.subr.bf16.mxu0 0
        %1231 = vmatpush1.bf16.msra.mxu0 %v1208
        %1232 = vmatprep.subr.bf16.mxu0 0
        %1233 = vmatpush1.bf16.msra.mxu0 %v1209
        %1234 = vmatprep.subr.bf16.mxu0 0
        %1235 = vmatpush1.bf16.msra.mxu0 0
        %1236 = vmatprep.subr.bf16.mxu0 0
        %1237 = vmatpush1.bf16.msra.mxu0 0
        %1238 = vmatprep.subr.bf16.mxu0 0
        %1239 = vmatpush1.bf16.msra.mxu0 0
        %1240 = vmatprep.subr.bf16.mxu0 0
        %1241 = vmatpush1.bf16.msra.mxu0 0
        %1242 = vmatprep.subr.bf16.mxu0 0
        %1243 = vmatpush1.bf16.msra.mxu0 0
        %1244 = vmatprep.subr.bf16.mxu0 0
        %1245 = vmatpush1.bf16.msra.mxu0 0
        %1246 = vmatprep.subr.bf16.mxu0 0
        %1247 = vmatpush1.bf16.msra.mxu0 0
        %1248 = vmatprep.subr.bf16.mxu0 0
        %1249 = vmatpush1.bf16.msra.mxu0 0
        %1250 = vmatprep.mubr.bf16.mxu0 0
        %1251 = vmatmul.mubr.bf16.gmra.mrb[0].mxu0 %v1144
        %v1252 = vpop.f32.mrb[0].mxu0
        %v1253 = vadd.f32 %v1168, %v1252
        %v1254 = vpop.f32.mrb[0].mxu0
        %v1255 = vpop.f32.mrb[0].mxu0
        %v1256 = vadd.f32 %v1168, %v1255
        %v1257 = vpop.f32.mrb[0].mxu0
        %1258 = vdwg.mxu0
        %v1259 = vmax.f32 %v1253, 0.0
        %v1260 = vmax.f32 %v1256, 0.0
        %s1261 = sadd.s32 %s692, 2
        %s1262 = sld [smem:[#allocation3 + %s1261]]
        %v1263 = vpack.c.bf16 %v1260, %v1259
        %s1264 = sadd.f32 %s1262, 1.0
        %v1265 = vstv %s1264
        %v1266 = vmul.f32 %v1265, %v1259
        %v1267 = vmul.f32 %v1265, %v1260
        %1268 = vmatprep.subr.bf16.mxu0 0
        %1269 = vmatpush1.bf16.msra.mxu0 %v1263
        %1270 = vmatprep.subr.bf16.mxu0 0
        %1271 = vmatpush1.bf16.msra.mxu0 0
        %1272 = vmatprep.subr.bf16.mxu0 0
        %1273 = vmatpush1.bf16.msra.mxu0 0
        %1274 = vmatprep.subr.bf16.mxu0 0
        %1275 = vmatpush1.bf16.msra.mxu0 0
        %1276 = vmatprep.subr.bf16.mxu0 0
        %1277 = vmatpush1.bf16.msra.mxu0 0
        %1278 = vmatprep.subr.bf16.mxu0 0
        %1279 = vmatpush1.bf16.msra.mxu0 0
        %1280 = vmatprep.subr.bf16.mxu0 0
        %1281 = vmatpush1.bf16.msra.mxu0 0
        %1282 = vmatprep.subr.bf16.mxu0 0
        %1283 = vmatpush1.bf16.msra.mxu0 0
        %1284 = vmatprep.subr.bf16.mxu0 0
        %1285 = vmatpush1.bf16.msra.mxu0 0
        %1286 = vmatprep.subr.bf16.mxu0 0
        %1287 = vmatpush1.bf16.msra.mxu0 0
        %1288 = vmatprep.subr.bf16.mxu0 0
        %1289 = vmatpush1.bf16.msra.mxu0 0
        %1290 = vmatprep.subr.bf16.mxu0 0
        %1291 = vmatpush1.bf16.msra.mxu0 0
        %1292 = vmatprep.subr.bf16.mxu0 0
        %1293 = vmatpush1.bf16.msra.mxu0 0
        %1294 = vmatprep.subr.bf16.mxu0 0
        %1295 = vmatpush1.bf16.msra.mxu0 0
        %1296 = vmatprep.subr.bf16.mxu0 0
        %1297 = vmatpush1.bf16.msra.mxu0 0
        %1298 = vmatprep.subr.bf16.mxu0 0
        %1299 = vmatpush1.bf16.msra.mxu0 0
        %1300 = vmatprep.mubr.bf16.mxu0 0
        %1301 = vmatmul.mubr.bf16.gmra.mrb[0].mxu0 %v706
        %v1302 = vpop.f32.mrb[0].mxu0
        %v1303 = vadd.f32 %v1266, %v1302
        %v1304 = vpop.f32.mrb[0].mxu0
        %v1305 = vpop.f32.mrb[0].mxu0
        %v1306 = vadd.f32 %v1267, %v1305
        %v1307 = vpop.f32.mrb[0].mxu0
        %1308 = vdwg.mxu0
        %v1309 = vpack.c.bf16 %v1306, %v1303
        %s1310 = scalar_lea.vmem %s498, 128 [#allocation13]
        %v1311 = vld [vmem:[%s1310] sm:$0xf]
        %v1312 = vld [vmem:[%s1310 + $0x4] sm:$0xf]
        %v1313 = vld [vmem:[%s1310 + $0x8] sm:$0xf]
        %v1314 = vld [vmem:[%s1310 + $0xc] sm:$0xf]
        %v1315 = vld [vmem:[%s1310 + $0x10] sm:$0xf]
        %v1316 = vld [vmem:[%s1310 + $0x14] sm:$0xf]
        %v1317 = vld [vmem:[%s1310 + $0x18] sm:$0xf]
        %v1318 = vld [vmem:[%s1310 + $0x1c] sm:$0xf]
        %v1319 = vld [vmem:[%s1310 + $0x20] sm:$0xf]
        %v1320 = vld [vmem:[%s1310 + $0x24] sm:$0xf]
        %v1321 = vld [vmem:[%s1310 + $0x28] sm:$0xf]
        %v1322 = vld [vmem:[%s1310 + $0x2c] sm:$0xf]
        %v1323 = vld [vmem:[%s1310 + $0x30] sm:$0xf]
        %v1324 = vld [vmem:[%s1310 + $0x34] sm:$0xf]
        %v1325 = vld [vmem:[%s1310 + $0x38] sm:$0xf]
        %v1326 = vld [vmem:[%s1310 + $0x3c] sm:$0xf]
        %s1327 = scalar_lea.vmem %s507, 2 [#allocation15]
        %v1328 = vld [vmem:[%s1327] sm:$0x1]
        %v1330 = vlaneseq
        %v1331 = vshrl.u32 %v1330, 7
        %v1332 = vsub.s32 0, %v1331
        %v1333 = vrot.slane %v1328, %v1332
        %v1351 = vunpack.c.l.b16 %v1311
        %v1352 = vunpack.c.l.b16 %v1312
        %v1353 = vunpack.c.l.b16 %v1313
        %v1354 = vunpack.c.l.b16 %v1314
        %v1355 = vunpack.c.l.b16 %v1315
        %v1356 = vunpack.c.l.b16 %v1316
        %v1357 = vunpack.c.l.b16 %v1317
        %v1358 = vunpack.c.l.b16 %v1318
        %v1359 = vunpack.c.l.b16 %v1319
        %v1360 = vunpack.c.l.b16 %v1320
        %v1361 = vunpack.c.l.b16 %v1321
        %v1362 = vunpack.c.l.b16 %v1322
        %v1363 = vunpack.c.l.b16 %v1323
        %v1364 = vunpack.c.l.b16 %v1324
        %v1365 = vunpack.c.l.b16 %v1325
        %v1366 = vunpack.c.l.b16 %v1326
        %v1367 = vpack.c.b16 %v1352, %v1351
        %v1368 = vpack.c.b16 %v1354, %v1353
        %v1369 = vpack.c.b16 %v1356, %v1355
        %v1370 = vpack.c.b16 %v1358, %v1357
        %v1371 = vpack.c.b16 %v1360, %v1359
        %v1372 = vpack.c.b16 %v1362, %v1361
        %v1373 = vpack.c.b16 %v1364, %v1363
        %v1374 = vpack.c.b16 %v1366, %v1365
        %1383 = vmatprep.subr.bf16.mxu0 0
        %1384 = vmatpush1.bf16.msra.mxu0 %v1367
        %1385 = vmatprep.subr.bf16.mxu0 0
        %1386 = vmatpush1.bf16.msra.mxu0 %v1368
        %1387 = vmatprep.subr.bf16.mxu0 0
        %1388 = vmatpush1.bf16.msra.mxu0 %v1369
        %1389 = vmatprep.subr.bf16.mxu0 0
        %1390 = vmatpush1.bf16.msra.mxu0 %v1370
        %1391 = vmatprep.subr.bf16.mxu0 0
        %1392 = vmatpush1.bf16.msra.mxu0 %v1371
        %1393 = vmatprep.subr.bf16.mxu0 0
        %1394 = vmatpush1.bf16.msra.mxu0 %v1372
        %1395 = vmatprep.subr.bf16.mxu0 0
        %1396 = vmatpush1.bf16.msra.mxu0 %v1373
        %1397 = vmatprep.subr.bf16.mxu0 0
        %1398 = vmatpush1.bf16.msra.mxu0 %v1374
        %1399 = vmatprep.subr.bf16.mxu0 0
        %1400 = vmatpush1.bf16.msra.mxu0 0
        %1401 = vmatprep.subr.bf16.mxu0 0
        %1402 = vmatpush1.bf16.msra.mxu0 0
        %1403 = vmatprep.subr.bf16.mxu0 0
        %1404 = vmatpush1.bf16.msra.mxu0 0
        %1405 = vmatprep.subr.bf16.mxu0 0
        %1406 = vmatpush1.bf16.msra.mxu0 0
        %1407 = vmatprep.subr.bf16.mxu0 0
        %1408 = vmatpush1.bf16.msra.mxu0 0
        %1409 = vmatprep.subr.bf16.mxu0 0
        %1410 = vmatpush1.bf16.msra.mxu0 0
        %1411 = vmatprep.subr.bf16.mxu0 0
        %1412 = vmatpush1.bf16.msra.mxu0 0
        %1413 = vmatprep.subr.bf16.mxu0 0
        %1414 = vmatpush1.bf16.msra.mxu0 0
        %1415 = vmatprep.mubr.bf16.mxu0 0
        %1416 = vmatmul.mubr.bf16.gmra.mrb[0].mxu0 %v1309
        %v1417 = vpop.f32.mrb[0].mxu0
        %v1418 = vadd.f32 %v1333, %v1417
        %v1419 = vpop.f32.mrb[0].mxu0
        %v1420 = vpop.f32.mrb[0].mxu0
        %v1421 = vadd.f32 %v1333, %v1420
        %v1422 = vpop.f32.mrb[0].mxu0
        %1423 = vdwg.mxu0
        %v1424 = vmax.f32 %v1418, 0.0
        %v1425 = vmax.f32 %v1421, 0.0
        %v1426 = vpack.c.bf16 %v1425, %v1424
        %s1427 = scalar_lea.vmem %s516, 128 [#allocation16]
        %v1428 = vld [vmem:[%s1427] sm:$0xf]
        %v1429 = vld [vmem:[%s1427 + $0x4] sm:$0xf]
        %v1430 = vld [vmem:[%s1427 + $0x8] sm:$0xf]
        %v1431 = vld [vmem:[%s1427 + $0xc] sm:$0xf]
        %v1432 = vld [vmem:[%s1427 + $0x10] sm:$0xf]
        %v1433 = vld [vmem:[%s1427 + $0x14] sm:$0xf]
        %v1434 = vld [vmem:[%s1427 + $0x18] sm:$0xf]
        %v1435 = vld [vmem:[%s1427 + $0x1c] sm:$0xf]
        %v1436 = vld [vmem:[%s1427 + $0x20] sm:$0xf]
        %v1437 = vld [vmem:[%s1427 + $0x24] sm:$0xf]
        %v1438 = vld [vmem:[%s1427 + $0x28] sm:$0xf]
        %v1439 = vld [vmem:[%s1427 + $0x2c] sm:$0xf]
        %v1440 = vld [vmem:[%s1427 + $0x30] sm:$0xf]
        %v1441 = vld [vmem:[%s1427 + $0x34] sm:$0xf]
        %v1442 = vld [vmem:[%s1427 + $0x38] sm:$0xf]
        %v1443 = vld [vmem:[%s1427 + $0x3c] sm:$0xf]
        %s1444 = scalar_lea.vmem %s525, 2 [#allocation18]
        %v1445 = vld [vmem:[%s1444] sm:$0x1]
        %v1447 = vlaneseq
        %v1448 = vshrl.u32 %v1447, 7
        %v1449 = vsub.s32 0, %v1448
        %v1450 = vrot.slane %v1445, %v1449
        %v1468 = vunpack.c.l.b16 %v1428
        %v1469 = vunpack.c.l.b16 %v1429
        %v1470 = vunpack.c.l.b16 %v1430
        %v1471 = vunpack.c.l.b16 %v1431
        %v1472 = vunpack.c.l.b16 %v1432
        %v1473 = vunpack.c.l.b16 %v1433
        %v1474 = vunpack.c.l.b16 %v1434
        %v1475 = vunpack.c.l.b16 %v1435
        %v1476 = vunpack.c.l.b16 %v1436
        %v1477 = vunpack.c.l.b16 %v1437
        %v1478 = vunpack.c.l.b16 %v1438
        %v1479 = vunpack.c.l.b16 %v1439
        %v1480 = vunpack.c.l.b16 %v1440
        %v1481 = vunpack.c.l.b16 %v1441
        %v1482 = vunpack.c.l.b16 %v1442
        %v1483 = vunpack.c.l.b16 %v1443
        %v1484 = vpack.c.b16 %v1469, %v1468
        %v1485 = vpack.c.b16 %v1471, %v1470
        %v1486 = vpack.c.b16 %v1473, %v1472
        %v1487 = vpack.c.b16 %v1475, %v1474
        %v1488 = vpack.c.b16 %v1477, %v1476
        %v1489 = vpack.c.b16 %v1479, %v1478
        %v1490 = vpack.c.b16 %v1481, %v1480
        %v1491 = vpack.c.b16 %v1483, %v1482
        %1500 = vmatprep.subr.bf16.mxu0 0
        %1501 = vmatpush1.bf16.msra.mxu0 %v1484
        %1502 = vmatprep.subr.bf16.mxu0 0
        %1503 = vmatpush1.bf16.msra.mxu0 %v1485
        %1504 = vmatprep.subr.bf16.mxu0 0
        %1505 = vmatpush1.bf16.msra.mxu0 %v1486
        %1506 = vmatprep.subr.bf16.mxu0 0
        %1507 = vmatpush1.bf16.msra.mxu0 %v1487
        %1508 = vmatprep.subr.bf16.mxu0 0
        %1509 = vmatpush1.bf16.msra.mxu0 %v1488
        %1510 = vmatprep.subr.bf16.mxu0 0
        %1511 = vmatpush1.bf16.msra.mxu0 %v1489
        %1512 = vmatprep.subr.bf16.mxu0 0
        %1513 = vmatpush1.bf16.msra.mxu0 %v1490
        %1514 = vmatprep.subr.bf16.mxu0 0
        %1515 = vmatpush1.bf16.msra.mxu0 %v1491
        %1516 = vmatprep.subr.bf16.mxu0 0
        %1517 = vmatpush1.bf16.msra.mxu0 0
        %1518 = vmatprep.subr.bf16.mxu0 0
        %1519 = vmatpush1.bf16.msra.mxu0 0
        %1520 = vmatprep.subr.bf16.mxu0 0
        %1521 = vmatpush1.bf16.msra.mxu0 0
        %1522 = vmatprep.subr.bf16.mxu0 0
        %1523 = vmatpush1.bf16.msra.mxu0 0
        %1524 = vmatprep.subr.bf16.mxu0 0
        %1525 = vmatpush1.bf16.msra.mxu0 0
        %1526 = vmatprep.subr.bf16.mxu0 0
        %1527 = vmatpush1.bf16.msra.mxu0 0
        %1528 = vmatprep.subr.bf16.mxu0 0
        %1529 = vmatpush1.bf16.msra.mxu0 0
        %1530 = vmatprep.subr.bf16.mxu0 0
        %1531 = vmatpush1.bf16.msra.mxu0 0
        %1532 = vmatprep.mubr.bf16.mxu0 0
        %1533 = vmatmul.mubr.bf16.gmra.mrb[0].mxu0 %v1426
        %v1534 = vpop.f32.mrb[0].mxu0
        %v1535 = vadd.f32 %v1450, %v1534
        %v1536 = vpop.f32.mrb[0].mxu0
        %v1537 = vpop.f32.mrb[0].mxu0
        %v1538 = vadd.f32 %v1450, %v1537
        %v1539 = vpop.f32.mrb[0].mxu0
        %1540 = vdwg.mxu0
        %v1541 = vadd.f32 %v1535, %v1538
        %v1542 = vrot.slane %v1541, 4
        %v1543 = vadd.f32 %v1541, %v1542
        %v1544 = vrot.slane %v1543, 2
        %v1545 = vadd.f32 %v1543, %v1544
        %v1546 = vrot.slane %v1545, 1
        %v1547 = vadd.f32 %v1545, %v1546
        %v1548 = vmul.f32 %v1535, %v1535
        %v1549 = vmul.f32 %v1538, %v1538
        %v1550 = vadd.f32 %v1548, %v1549
        %v1551 = vrot.slane %v1550, 4
        %v1552 = vadd.f32 %v1550, %v1551
        %v1553 = vrot.slane %v1552, 2
        %v1554 = vadd.f32 %v1552, %v1553
        %v1555 = vrot.slane %v1554, 1
        %v1556 = vadd.f32 %v1554, %v1555
        %v1557 = vmul.f32 %v1547, 0.0625
        %v1558 = vmul.f32 %v1557, 16.0
        %v1559 = vmul.f32 %v1558, %v1557
        %v1560 = vsub.f32 %v1556, %v1559
        %v1561 = vrcp.pop 15.0
        %v1562 = vmul.f32 %v1560, %v1561
        %v1563 = vmax.f32 %v1562, 0.0
        %v1564 = vlaneseq
        %v1565 = vand.u32 %v1564, 127
        %vm1566 = vcmp.lt.s32.totalorder %v1565, 32
        %v1567 = vsel %vm1566, %v1563, 1.0
        %v1568 = vsub.f32 %v1535, %v1557
        %v1569 = vsub.f32 %v1538, %v1557
        %v1570 = vrsqrt.pop %v1567
        %v1571 = vmul.f32 %v1568, %v1570
        %v1572 = vmul.f32 %v1569, %v1570
        %1573 = vst [vmem:[%s584] sm:$0xff] %v1571
        %1574 = vst [vmem:[%s584 + $0x8] sm:$0xff] %v1572
        %s1575 = sand.u32 %s266, 1
        %s1576 = scalar_lea.sflag [#allocation6], %s1575
        %s1577 = sand.u32 %s266, 1
        %s1578 = smul.addr %s1577, 16
        %s1579 = scalar_lea.vmem [#allocation19], %s1578
        // Predicated region
        $region93: #{tpu_custom_call.1} parent=55 // pred_check
          %p1580 = pneg %p276
        $region94: #{tpu_custom_call.1} parent=55 // pred_check_branch
          %1582 = sbr.rel (%p1580) target = $region96
        $region95: #{tpu_custom_call.1} parent=55 // pred_region
          %s1584 = ssub.s32 256, 256
          %1585 = vsyncadd %s1576, %s1584
          %s1586 = smul.addr %s39, 2
          %s1587 = smul.addr %s1586, 128
          %s1588 = scalar_lea.hbm %s10, %s1587
          %s1589 = sshll.u32 %s1579, 4
          %s1590 = int_to_ptr.vmem [resolvable:$true] %s1589
          %1595 = dma.vmem_to_hbm [thread:$0]  %s1590, 256, %s1588, %s1576, 128, 128, 8
        $region96: #{tpu_custom_call.1} parent=55 // pred_fallthru
          _
      $region56: #{tpu_custom_call.1} parent=5 // pred_fallthru
        _
      %p1596 = scmp.le.s32.totalorder 2, %s34
      // Predicated region
      $region97: #{tpu_custom_call.1} parent=5 // pred_check
        %p1597 = pneg %p1596
      $region98: #{tpu_custom_call.1} parent=5 // pred_check_branch
        %1599 = sbr.rel (%p1597) target = $region100
      $region99: #{tpu_custom_call.1} parent=5 // pred_region
        %s1600 = ssub.s32 %s34, 2
        // Predicated region
        $region101: #{tpu_custom_call.1} parent=99 // pred_check
          %p1601 = pneg %p282
        $region102: #{tpu_custom_call.1} parent=99 // pred_check_branch
          %1603 = sbr.rel (%p1601) target = $region104
        $region103: #{tpu_custom_call.1} parent=99 // pred_region
          %s1604 = sand.u32 %s267, 1
          %s1605 = scalar_lea.sflag [#allocation6], %s1604
          %s1606 = sand.u32 %s267, 1
          %s1607 = smul.addr %s1606, 16
          %s1608 = scalar_lea.vmem [#allocation19], %s1607
          %1609 = dma.done %s1605, 256
        $region104: #{tpu_custom_call.1} parent=99 // pred_fallthru
          _
      $region100: #{tpu_custom_call.1} parent=5 // pred_fallthru
        _
    $region6: #{tpu_custom_call.1} parent=1 // loop_footer
      %s38 = sadd.s32 1, %s34
    $region7: #{tpu_custom_call.1} parent=1 // loop_footer_branch
      %33 = sbr.rel target = $region3
    $region8: #{tpu_custom_call.1} parent=1 // loop_exit
      _
    %1610 = vsyncpa [#allocation5], 1
    %s1611 = scalar_lea.sflag [#allocation5], 1
    %1612 = vsyncpa %s1611, 1
    %1613 = vsyncpa [#allocation8], 1
    %1614 = vsyncpa [#allocation11], 1
    %s1615 = scalar_lea.sflag [#allocation11], 1
    %1616 = vsyncpa %s1615, 1
    %1617 = vsyncpa [#allocation14], 1
    %s1618 = scalar_lea.sflag [#allocation14], 1
    %1619 = vsyncpa %s1618, 1
    %1620 = vsyncpa [#allocation17], 1
    %s1621 = scalar_lea.sflag [#allocation17], 1
    %1622 = vsyncpa %s1621, 1
    %1623 = vsyncpa [#allocation6], 1
    %s1624 = scalar_lea.sflag [#allocation6], 1
    %1625 = vsyncpa %s1624, 1

</llo_original>
